<compile_context>
chip_gen: v7x
topology: tpu7x:2x2x1
jax: 0.10.0
libtpu: 0.0.40
codegen_flags: <defaults>
</compile_context>

<pallas_src>
import functools

import jax
import jax.numpy as jnp
from jax.experimental import pallas as pl
from jax.experimental.pallas import tpu as pltpu  # noqa: F401  (kept for TODOs below)


# ------------------------------ fused kernel ---------------------------------

def _edu_encoder_kernel(pooled_ref, types_ref, mask_ref, *rest,
                        num_layers, batch, seq, hidden, vocab):
    B, T, H, V = batch, seq, hidden, vocab
    B2 = 2 * B
    N = T * B                                  # time-major rows: r = t*B + b
    f32 = jnp.float32

    w_refs = rest[:-1]                         # 4 refs for layer 0, then 3/layer
    out_ref = rest[-1]                         # (N, 2H) time-major output

    # ---------------- hoisted constants (outside every recurrence) -----------
    # Block mask for the packed [h_f | 0 ; 0 | h_b] carry: one (2B,2H)@(2H,4H)
    # matmul per step evaluates h_f@Whh_f and h_b@Whh_b simultaneously.
    row = jax.lax.broadcasted_iota(jnp.int32, (B2, 2 * H), 0)
    col = jax.lax.broadcasted_iota(jnp.int32, (B2, 2 * H), 1)
    blkmask = jnp.logical_or(jnp.logical_and(row < B, col < H),
                             jnp.logical_and(row >= B, col >= H)).astype(f32)

    # All per-step masks in ONE small (2B, T) tile; column s = [m(:,s); m(:,T-1-s)].
    step_mask = mask_ref[...]

    y = None
    for layer in range(num_layers):
        if layer == 0:
            wp_ref, ew_ref, b_ref, whh_ref = w_refs[:4]
            # EDU-type embedding folded through W_ih in the wrapper: the one-hot
            # matmul goes straight to gate space (no (N, D) intermediate).
            ids = types_ref[...]                                         # (N, 1)
            onehot = (jax.lax.broadcasted_iota(jnp.int32, (N, V), 1)
                      == ids).astype(f32)                                # (N, V)
            # Hoisted input projection: both directions, all T steps, 2 matmuls.
            gx = (jnp.dot(pooled_ref[...], wp_ref[...],
                          preferred_element_type=f32)
                  + jnp.dot(onehot, ew_ref[...], preferred_element_type=f32)
                  + b_ref[...])                                          # (N, 8H)
        else:
            wih_ref, b_ref, whh_ref = w_refs[4 + 3 * (layer - 1):4 + 3 * layer]
            # Previous layer's activations are a flat (N, 2H) time-major value
            # held in vregs -> direct matmul operand, no gather / no scratch.
            gx = jnp.dot(y, wih_ref[...], preferred_element_type=f32) + b_ref[...]
        whh = whh_ref[...]                                               # (2H, 4H)

        h_pk = jnp.zeros((B2, 2 * H), f32)     # packed [h_f | 0 ; 0 | h_b]
        c = jnp.zeros((B2, H), f32)
        hs_f, hs_b = [], []

        # Fully unrolled serial recurrence; forward time tf = s and backward
        # time tb = T-1-s advance together with ONE recurrent matmul per step.
        for s in range(T):
            tf, tb = s, T - 1 - s
            # Contiguous time-major row blocks; the 0:4H / 4H:8H halves are
            # 128-lane (vreg-aligned) column selections of the (N, 8H) tile.
            gxs = jnp.concatenate(
                [gx[tf * B:(tf + 1) * B, 0:4 * H],
                 gx[tb * B:(tb + 1) * B, 4 * H:8 * H]], axis=0)          # (2B, 4H)
            gates = gxs + jnp.dot(h_pk, whh, preferred_element_type=f32)

            # Full-tile nonlinearities: 2 EUP pushes on (2B, 128) instead of
            # four 32-lane partials; gate order [i, f, g, o] as in the spec.
            sg = jax.nn.sigmoid(gates)
            th = jnp.tanh(gates)
            i_g = sg[:, 0:H]
            f_g = sg[:, H:2 * H]
            g_g = th[:, 2 * H:3 * H]
            o_g = sg[:, 3 * H:4 * H]
            c = f_g * c + i_g * g_g
            h_out = o_g * jnp.tanh(c)

            msk = step_mask[:, s:s + 1]        # (2B, 1): [m_fwd(tf); m_bwd(tb)]
            h_out = h_out * msk                # masked step == reset to the
            c = c * msk                        # zero initial state

            hs_f.append(h_out[0:B])            # fwd output at time tf
            hs_b.append(h_out[B:B2])           # bwd output at time tb

            # Repack carry for the next block-structured recurrent matmul.
            # TODO(synk): this small lane concat could also be routed through
            #   the idle XLU with pltpu.roll + precomputed selects.
            h_pk = jnp.concatenate([h_out, h_out], axis=1) * blkmask

        # Accumulate the whole layer output in vregs and materialize it once:
        # (N, 2H) time-major = [fwd outputs | time-aligned bwd outputs].
        y = jnp.concatenate(
            [jnp.concatenate(hs_f, axis=0),
             jnp.concatenate(hs_b[::-1], axis=0)], axis=1)

    out_ref[...] = y                           # single store for the full output


# ------------------------------- wrapper --------------------------------------

@jax.jit
def edu_encoder_forward(params, word_represents, masks, word_denominator, edu_types):
    B, E, L, Hwr = word_represents.shape
    T, N = E, B * E
    H = params["lstm_layers"][0]["whh_f"].shape[0]
    V, D = params["edu_type_embed"].shape
    num_layers = len(params["lstm_layers"])
    f32 = jnp.float32

    # AvgPooling as a wrapper-side XLA reduce: the kernel's input is (N, Hwr),
    # not (N, L, Hwr) -> L x less kernel input DMA.
    pooled = (jnp.sum(word_represents.astype(f32), axis=2)
              / word_denominator.astype(f32)[:, :, None])               # (B, E, Hwr)
    # Time-major working layout: row r = t*B + b.
    pooled_tm = jnp.transpose(pooled, (1, 0, 2)).reshape(N, Hwr)
    types_tm = jnp.transpose(edu_types.astype(jnp.int32), (1, 0)).reshape(N, 1)

    m = masks.astype(f32)
    step_mask = jnp.concatenate([m, m[:, ::-1]], axis=0)                 # (2B, T)

    # Parameter-only precomputes: stack fwd/bwd weights; fold the EDU-type
    # embedding through layer-0's W_ih (E_w = embed @ W_ih[type rows]).
    embed = params["edu_type_embed"].astype(f32)
    layer_args = []
    for li, lp in enumerate(params["lstm_layers"]):
        wih = jnp.concatenate([lp["wih_f"], lp["wih_b"]], axis=1).astype(f32)  # (In, 8H)
        whh = jnp.concatenate([lp["whh_f"], lp["whh_b"]], axis=0).astype(f32)  # (2H, 4H)
        bias = jnp.concatenate([lp["b_f"], lp["b_b"]], axis=1).astype(f32)     # (1, 8H)
        if li == 0:
            layer_args += [wih[0:Hwr, :],                 # (Hwr, 8H)
                           embed @ wih[Hwr:Hwr + D, :],   # (V, 8H) folded embed
                           bias, whh]
        else:
            layer_args += [wih, bias, whh]

    kernel = functools.partial(_edu_encoder_kernel, num_layers=num_layers,
                               batch=B, seq=T, hidden=H, vocab=V)

    # Advisory cost estimate for XLA's scheduler (tiny, latency-bound call).
    flops = 2 * N * (Hwr + V) * 8 * H
    flops += (num_layers - 1) * 2 * N * (2 * H) * (8 * H)
    flops += num_layers * T * 2 * (2 * B) * (2 * H) * (4 * H)
    transcendentals = num_layers * T * (2 * (2 * B) * 4 * H + (2 * B) * H)
    bytes_accessed = 4 * (pooled_tm.size + types_tm.size + step_mask.size
                          + sum(a.size for a in layer_args) + N * 2 * H)

    # TODO(synk): at production B*E add an N-tile grid + BlockSpecs with
    #   dimension_semantics=("parallel",) (v7x: 2 TensorCores, 64 MiB VMEM) and
    #   stream the pooling via a (tileN, L, Hwr) BlockSpec instead of XLA.
    # TODO(synk): on v6e/v7x the projection weights could be cast to bf16 with
    #   f32 accumulation; kept f32 here to preserve the 1e-4 parity check (and
    #   v5e has no bf16 VPU/EUP for the gate math anyway).
    out_tm = pl.pallas_call(
        kernel,
        out_shape=jax.ShapeDtypeStruct((N, 2 * H), f32),
        cost_estimate=pl.CostEstimate(flops=int(flops),
                                      transcendentals=int(transcendentals),
                                      bytes_accessed=int(bytes_accessed)),
    )(pooled_tm, types_tm, step_mask, *layer_args)

    # outputs.transpose(1, 0): time-major (E, B, 2H) -> (B, E, 2H).  Pure layout
    # plumbing on the already-assembled slab, done at the XLA level.
    return jnp.transpose(out_tm.reshape(E, B, 2 * H), (1, 0, 2))


# ---------------------------- pure-JAX reference -------------------------------

def _lstm_layer_ref(x_tm, m_tm, p):
    T, B, _ = x_tm.shape
    H = p["whh_f"].shape[0]

    def run(wih, whh, b, times):
        h = jnp.zeros((B, H), jnp.float32)
        c = jnp.zeros((B, H), jnp.float32)
        outs = [None] * T
        for t in times:
            gates = x_tm[t] @ wih + h @ whh + b[0]
            i = jax.nn.sigmoid(gates[:, :H])
            f = jax.nn.sigmoid(gates[:, H:2 * H])
            g = jnp.tanh(gates[:, 2 * H:3 * H])
            o = jax.nn.sigmoid(gates[:, 3 * H:])
            c = f * c + i * g
            h = o * jnp.tanh(c)
            h = h * m_tm[t]
            c = c * m_tm[t]
            outs[t] = h
        return jnp.stack(outs, 0)

    out_f = run(p["wih_f"], p["whh_f"], p["b_f"], range(T))
    out_b = run(p["wih_b"], p["whh_b"], p["b_b"], reversed(range(T)))
    return jnp.concatenate([out_f, out_b], axis=-1)


def edu_encoder_forward_ref(params, word_represents, masks, word_denominator, edu_types):
    B, E, L, H = word_represents.shape
    x = word_represents.reshape(B * E, L, H)
    pooled = jnp.sum(x, axis=1) / word_denominator.reshape(-1, 1)
    pooled = pooled.reshape(B, E, H)
    type_embs = jnp.take(params["edu_type_embed"], edu_types, axis=0)
    lstm_in = jnp.concatenate([pooled, type_embs], axis=-1)
    x_tm = jnp.transpose(lstm_in, (1, 0, 2))
    m_tm = jnp.transpose(masks, (1, 0))[:, :, None].astype(jnp.float32)
    h = x_tm
    for layer_p in params["lstm_layers"]:
        h = _lstm_layer_ref(h, m_tm, layer_p)
    return jnp.transpose(h, (1, 0, 2))


# --------------------------------- param init ----------------------------------

def init_params(key, input_size, hidden, num_layers, vocab_size, type_dims):
    params = {"lstm_layers": []}
    keys = jax.random.split(key, 1 + num_layers)
    params["edu_type_embed"] = 0.1 * jax.random.normal(
        keys[0], (vocab_size, type_dims), jnp.float32)
    in_size = input_size
    for l in range(num_layers):
        ks = jax.random.split(keys[1 + l], 6)
        lp = {
            "wih_f": 0.1 * jax.random.normal(ks[0], (in_size, 4 * hidden), jnp.float32),
            "whh_f": 0.1 * jax.random.normal(ks[1], (hidden, 4 * hidden), jnp.float32),
            "b_f":   0.1 * jax.random.normal(ks[2], (1, 4 * hidden), jnp.float32),
            "wih_b": 0.1 * jax.random.normal(ks[3], (in_size, 4 * hidden), jnp.float32),
            "whh_b": 0.1 * jax.random.normal(ks[4], (hidden, 4 * hidden), jnp.float32),
            "b_b":   0.1 * jax.random.normal(ks[5], (1, 4 * hidden), jnp.float32),
        }
        params["lstm_layers"].append(lp)
        in_size = 2 * hidden
    return params


# ------------------------------------ main --------------------------------------

if __name__ == "__main__":
    # config: lstm_hiddens=32, edu_type_dims=32, lstm_layers=2, EDUtype_size=10
    lstm_hiddens = 32
    edu_type_dims = 32
    lstm_layers = 2
    edu_type_vocab = 10

    B, E, L = 2, 8, 6                 # batch, EDU_num, EDU_len
    H = 2 * lstm_hiddens              # word_represents hidden = lstm_hiddens*2

    key = jax.random.PRNGKey(0)
    k_wr, k_len, k_typ, k_par = jax.random.split(key, 4)

    word_represents = jax.random.normal(k_wr, (B, E, L, H), jnp.float32)

    # valid-token counts per EDU (>=1 to avoid div-by-zero, as in the real pipeline)
    word_denominator = jax.random.randint(k_len, (B, E), 1, L + 1).astype(jnp.float32)

    # EDU-level mask: batch 0 has 8 valid EDUs, batch 1 has 5
    masks = jnp.ones((B, E), jnp.float32).at[1, 5:].set(0.0)

    edu_types = jax.random.randint(k_typ, (B, E), 0, edu_type_vocab).astype(jnp.int32)

    params = init_params(k_par,
                         input_size=H + edu_type_dims,
                         hidden=lstm_hiddens,
                         num_layers=lstm_layers,
                         vocab_size=edu_type_vocab,
                         type_dims=edu_type_dims)

    out = edu_encoder_forward(params, word_represents, masks, word_denominator, edu_types)
    out = jax.block_until_ready(out)

    ref = edu_encoder_forward_ref(params, word_represents, masks, word_denominator, edu_types)
    ref = jax.block_until_ready(ref)

    assert out.shape == (B, E, 2 * lstm_hiddens), out.shape
    assert jnp.allclose(out, ref, atol=1e-4, rtol=1e-4), float(jnp.max(jnp.abs(out - ref)))

    print("KERNEL_OK")
</pallas_src>

<mosaic_0001>
module attributes {stable_mosaic.version = 11 : i64} {
  func.func @_edu_encoder_kernel(%arg0: memref<16x64xf32, #tpu.memory_space<vmem>>, %arg1: memref<16x1xi32, #tpu.memory_space<vmem>>, %arg2: memref<4x8xf32, #tpu.memory_space<vmem>>, %arg3: memref<64x256xf32, #tpu.memory_space<vmem>>, %arg4: memref<10x256xf32, #tpu.memory_space<vmem>>, %arg5: memref<1x256xf32, #tpu.memory_space<vmem>>, %arg6: memref<64x128xf32, #tpu.memory_space<vmem>>, %arg7: memref<64x256xf32, #tpu.memory_space<vmem>>, %arg8: memref<1x256xf32, #tpu.memory_space<vmem>>, %arg9: memref<64x128xf32, #tpu.memory_space<vmem>>, %arg10: memref<16x64xf32, #tpu.memory_space<vmem>>) attributes {dimension_semantics = [], scalar_prefetch = 0 : i64, scratch_operands = 0 : i64, tpu.core_type = #tpu.core_type<tc>} {
    %0 = tpu.iota {dimensions = array<i32: 0>} : vector<4x64xi32>
    %1 = tpu.iota {dimensions = array<i32: 1>} : vector<4x64xi32>
    %c2_i32 = arith.constant 2 : i32
    %2 = vector.broadcast %c2_i32 : i32 to vector<4x64xi32>
    %3 = arith.cmpi slt, %0, %2 : vector<4x64xi32>
    %c32_i32 = arith.constant 32 : i32
    %4 = vector.broadcast %c32_i32 : i32 to vector<4x64xi32>
    %5 = arith.cmpi slt, %1, %4 : vector<4x64xi32>
    %6 = arith.andi %3, %5 : vector<4x64xi1>
    %c2_i32_0 = arith.constant 2 : i32
    %7 = vector.broadcast %c2_i32_0 : i32 to vector<4x64xi32>
    %8 = arith.cmpi sge, %0, %7 : vector<4x64xi32>
    %c32_i32_1 = arith.constant 32 : i32
    %9 = vector.broadcast %c32_i32_1 : i32 to vector<4x64xi32>
    %10 = arith.cmpi sge, %1, %9 : vector<4x64xi32>
    %11 = arith.andi %8, %10 : vector<4x64xi1>
    %12 = arith.ori %6, %11 : vector<4x64xi1>
    %13 = arith.extui %12 : vector<4x64xi1> to vector<4x64xi32>
    %14 = arith.sitofp %13 : vector<4x64xi32> to vector<4x64xf32>
    %c0 = arith.constant 0 : index
    %c0_2 = arith.constant 0 : index
    %15 = vector.load %arg2[%c0, %c0_2] : memref<4x8xf32, #tpu.memory_space<vmem>>, vector<4x8xf32>
    %c0_3 = arith.constant 0 : index
    %c0_4 = arith.constant 0 : index
    %16 = vector.load %arg1[%c0_3, %c0_4] : memref<16x1xi32, #tpu.memory_space<vmem>>, vector<16x1xi32>
    %17 = tpu.iota {dimensions = array<i32: 1>} : vector<16x10xi32>
    %18 = vector.broadcast %16 : vector<16x1xi32> to vector<16x10xi32>
    %19 = arith.cmpi eq, %17, %18 : vector<16x10xi32>
    %20 = arith.extui %19 : vector<16x10xi1> to vector<16x10xi32>
    %21 = arith.sitofp %20 : vector<16x10xi32> to vector<16x10xf32>
    %c0_5 = arith.constant 0 : index
    %c0_6 = arith.constant 0 : index
    %22 = vector.load %arg0[%c0_5, %c0_6] : memref<16x64xf32, #tpu.memory_space<vmem>>, vector<16x64xf32>
    %c0_7 = arith.constant 0 : index
    %c0_8 = arith.constant 0 : index
    %23 = vector.load %arg3[%c0_7, %c0_8] : memref<64x256xf32, #tpu.memory_space<vmem>>, vector<64x256xf32>
    %cst = arith.constant dense<0.000000e+00> : vector<16x256xf32>
    %24 = tpu.matmul %22, %23, %cst {dimension_numbers = #tpu.dot_dimension_numbers<[1], [0], [0], [1], [0, 0, 1, 1], [], []>} : vector<16x64xf32>, vector<64x256xf32>, vector<16x256xf32> -> vector<16x256xf32>
    %c0_9 = arith.constant 0 : index
    %c0_10 = arith.constant 0 : index
    %25 = vector.load %arg4[%c0_9, %c0_10] : memref<10x256xf32, #tpu.memory_space<vmem>>, vector<10x256xf32>
    %cst_11 = arith.constant dense<0.000000e+00> : vector<16x256xf32>
    %26 = tpu.matmul %21, %25, %cst_11 {dimension_numbers = #tpu.dot_dimension_numbers<[1], [0], [0], [1], [0, 0, 1, 1], [], []>} : vector<16x10xf32>, vector<10x256xf32>, vector<16x256xf32> -> vector<16x256xf32>
    %27 = arith.addf %24, %26 : vector<16x256xf32>
    %c0_12 = arith.constant 0 : index
    %c0_13 = arith.constant 0 : index
    %28 = vector.load %arg5[%c0_12, %c0_13] : memref<1x256xf32, #tpu.memory_space<vmem>>, vector<1x256xf32>
    %29 = vector.broadcast %28 : vector<1x256xf32> to vector<16x256xf32>
    %30 = arith.addf %27, %29 : vector<16x256xf32>
    %c0_14 = arith.constant 0 : index
    %c0_15 = arith.constant 0 : index
    %31 = vector.load %arg6[%c0_14, %c0_15] : memref<64x128xf32, #tpu.memory_space<vmem>>, vector<64x128xf32>
    %cst_16 = arith.constant 0.000000e+00 : f32
    %32 = vector.broadcast %cst_16 : f32 to vector<4x64xf32>
    %cst_17 = arith.constant 0.000000e+00 : f32
    %33 = vector.broadcast %cst_17 : f32 to vector<4x32xf32>
    %34 = vector.extract_strided_slice %30 {offsets = [0, 0], sizes = [2, 128], strides = [1, 1]} : vector<16x256xf32> to vector<2x128xf32>
    %35 = vector.extract_strided_slice %30 {offsets = [14, 128], sizes = [2, 128], strides = [1, 1]} : vector<16x256xf32> to vector<2x128xf32>
    %36 = tpu.concatenate %34, %35 in 0 : vector<2x128xf32>, vector<2x128xf32> -> vector<4x128xf32>
    %cst_18 = arith.constant dense<0.000000e+00> : vector<4x128xf32>
    %37 = tpu.matmul %32, %31, %cst_18 {dimension_numbers = #tpu.dot_dimension_numbers<[1], [0], [0], [1], [0, 0, 1, 1], [], []>} : vector<4x64xf32>, vector<64x128xf32>, vector<4x128xf32> -> vector<4x128xf32>
    %38 = arith.addf %36, %37 : vector<4x128xf32>
    %39 = arith.negf %38 : vector<4x128xf32>
    %40 = math.exp %39 : vector<4x128xf32>
    %cst_19 = arith.constant 1.000000e+00 : f32
    %41 = vector.broadcast %cst_19 : f32 to vector<4x128xf32>
    %42 = arith.addf %41, %40 : vector<4x128xf32>
    %43 = arith.divf %41, %42 : vector<4x128xf32>
    %44 = math.tanh %38 : vector<4x128xf32>
    %45 = vector.extract_strided_slice %43 {offsets = [0, 0], sizes = [4, 32], strides = [1, 1]} : vector<4x128xf32> to vector<4x32xf32>
    %46 = vector.extract_strided_slice %43 {offsets = [0, 32], sizes = [4, 32], strides = [1, 1]} : vector<4x128xf32> to vector<4x32xf32>
    %47 = vector.extract_strided_slice %44 {offsets = [0, 64], sizes = [4, 32], strides = [1, 1]} : vector<4x128xf32> to vector<4x32xf32>
    %48 = vector.extract_strided_slice %43 {offsets = [0, 96], sizes = [4, 32], strides = [1, 1]} : vector<4x128xf32> to vector<4x32xf32>
    %49 = arith.mulf %46, %33 : vector<4x32xf32>
    %50 = arith.mulf %45, %47 : vector<4x32xf32>
    %51 = arith.addf %49, %50 : vector<4x32xf32>
    %52 = math.tanh %51 : vector<4x32xf32>
    %53 = arith.mulf %48, %52 : vector<4x32xf32>
    %54 = vector.extract_strided_slice %15 {offsets = [0, 0], sizes = [4, 1], strides = [1, 1]} : vector<4x8xf32> to vector<4x1xf32>
    %55 = vector.broadcast %54 : vector<4x1xf32> to vector<4x32xf32>
    %56 = arith.mulf %53, %55 : vector<4x32xf32>
    %57 = vector.broadcast %54 : vector<4x1xf32> to vector<4x32xf32>
    %58 = arith.mulf %51, %57 : vector<4x32xf32>
    %59 = vector.extract_strided_slice %56 {offsets = [0, 0], sizes = [2, 32], strides = [1, 1]} : vector<4x32xf32> to vector<2x32xf32>
    %60 = vector.extract_strided_slice %56 {offsets = [2, 0], sizes = [2, 32], strides = [1, 1]} : vector<4x32xf32> to vector<2x32xf32>
    %61 = tpu.concatenate %56, %56 in 1 : vector<4x32xf32>, vector<4x32xf32> -> vector<4x64xf32>
    %62 = arith.mulf %61, %14 : vector<4x64xf32>
    %63 = vector.extract_strided_slice %30 {offsets = [2, 0], sizes = [2, 128], strides = [1, 1]} : vector<16x256xf32> to vector<2x128xf32>
    %64 = vector.extract_strided_slice %30 {offsets = [12, 128], sizes = [2, 128], strides = [1, 1]} : vector<16x256xf32> to vector<2x128xf32>
    %65 = tpu.concatenate %63, %64 in 0 : vector<2x128xf32>, vector<2x128xf32> -> vector<4x128xf32>
    %cst_20 = arith.constant dense<0.000000e+00> : vector<4x128xf32>
    %66 = tpu.matmul %62, %31, %cst_20 {dimension_numbers = #tpu.dot_dimension_numbers<[1], [0], [0], [1], [0, 0, 1, 1], [], []>} : vector<4x64xf32>, vector<64x128xf32>, vector<4x128xf32> -> vector<4x128xf32>
    %67 = arith.addf %65, %66 : vector<4x128xf32>
    %68 = arith.negf %67 : vector<4x128xf32>
    %69 = math.exp %68 : vector<4x128xf32>
    %cst_21 = arith.constant 1.000000e+00 : f32
    %70 = vector.broadcast %cst_21 : f32 to vector<4x128xf32>
    %71 = arith.addf %70, %69 : vector<4x128xf32>
    %72 = arith.divf %70, %71 : vector<4x128xf32>
    %73 = math.tanh %67 : vector<4x128xf32>
    %74 = vector.extract_strided_slice %72 {offsets = [0, 0], sizes = [4, 32], strides = [1, 1]} : vector<4x128xf32> to vector<4x32xf32>
    %75 = vector.extract_strided_slice %72 {offsets = [0, 32], sizes = [4, 32], strides = [1, 1]} : vector<4x128xf32> to vector<4x32xf32>
    %76 = vector.extract_strided_slice %73 {offsets = [0, 64], sizes = [4, 32], strides = [1, 1]} : vector<4x128xf32> to vector<4x32xf32>
    %77 = vector.extract_strided_slice %72 {offsets = [0, 96], sizes = [4, 32], strides = [1, 1]} : vector<4x128xf32> to vector<4x32xf32>
    %78 = arith.mulf %75, %58 : vector<4x32xf32>
    %79 = arith.mulf %74, %76 : vector<4x32xf32>
    %80 = arith.addf %78, %79 : vector<4x32xf32>
    %81 = math.tanh %80 : vector<4x32xf32>
    %82 = arith.mulf %77, %81 : vector<4x32xf32>
    %83 = vector.extract_strided_slice %15 {offsets = [0, 1], sizes = [4, 1], strides = [1, 1]} : vector<4x8xf32> to vector<4x1xf32>
    %84 = vector.broadcast %83 : vector<4x1xf32> to vector<4x32xf32>
    %85 = arith.mulf %82, %84 : vector<4x32xf32>
    %86 = vector.broadcast %83 : vector<4x1xf32> to vector<4x32xf32>
    %87 = arith.mulf %80, %86 : vector<4x32xf32>
    %88 = vector.extract_strided_slice %85 {offsets = [0, 0], sizes = [2, 32], strides = [1, 1]} : vector<4x32xf32> to vector<2x32xf32>
    %89 = vector.extract_strided_slice %85 {offsets = [2, 0], sizes = [2, 32], strides = [1, 1]} : vector<4x32xf32> to vector<2x32xf32>
    %90 = tpu.concatenate %85, %85 in 1 : vector<4x32xf32>, vector<4x32xf32> -> vector<4x64xf32>
    %91 = arith.mulf %90, %14 : vector<4x64xf32>
    %92 = vector.extract_strided_slice %30 {offsets = [4, 0], sizes = [2, 128], strides = [1, 1]} : vector<16x256xf32> to vector<2x128xf32>
    %93 = vector.extract_strided_slice %30 {offsets = [10, 128], sizes = [2, 128], strides = [1, 1]} : vector<16x256xf32> to vector<2x128xf32>
    %94 = tpu.concatenate %92, %93 in 0 : vector<2x128xf32>, vector<2x128xf32> -> vector<4x128xf32>
    %cst_22 = arith.constant dense<0.000000e+00> : vector<4x128xf32>
    %95 = tpu.matmul %91, %31, %cst_22 {dimension_numbers = #tpu.dot_dimension_numbers<[1], [0], [0], [1], [0, 0, 1, 1], [], []>} : vector<4x64xf32>, vector<64x128xf32>, vector<4x128xf32> -> vector<4x128xf32>
    %96 = arith.addf %94, %95 : vector<4x128xf32>
    %97 = arith.negf %96 : vector<4x128xf32>
    %98 = math.exp %97 : vector<4x128xf32>
    %cst_23 = arith.constant 1.000000e+00 : f32
    %99 = vector.broadcast %cst_23 : f32 to vector<4x128xf32>
    %100 = arith.addf %99, %98 : vector<4x128xf32>
    %101 = arith.divf %99, %100 : vector<4x128xf32>
    %102 = math.tanh %96 : vector<4x128xf32>
    %103 = vector.extract_strided_slice %101 {offsets = [0, 0], sizes = [4, 32], strides = [1, 1]} : vector<4x128xf32> to vector<4x32xf32>
    %104 = vector.extract_strided_slice %101 {offsets = [0, 32], sizes = [4, 32], strides = [1, 1]} : vector<4x128xf32> to vector<4x32xf32>
    %105 = vector.extract_strided_slice %102 {offsets = [0, 64], sizes = [4, 32], strides = [1, 1]} : vector<4x128xf32> to vector<4x32xf32>
    %106 = vector.extract_strided_slice %101 {offsets = [0, 96], sizes = [4, 32], strides = [1, 1]} : vector<4x128xf32> to vector<4x32xf32>
    %107 = arith.mulf %104, %87 : vector<4x32xf32>
    %108 = arith.mulf %103, %105 : vector<4x32xf32>
    %109 = arith.addf %107, %108 : vector<4x32xf32>
    %110 = math.tanh %109 : vector<4x32xf32>
    %111 = arith.mulf %106, %110 : vector<4x32xf32>
    %112 = vector.extract_strided_slice %15 {offsets = [0, 2], sizes = [4, 1], strides = [1, 1]} : vector<4x8xf32> to vector<4x1xf32>
    %113 = vector.broadcast %112 : vector<4x1xf32> to vector<4x32xf32>
    %114 = arith.mulf %111, %113 : vector<4x32xf32>
    %115 = vector.broadcast %112 : vector<4x1xf32> to vector<4x32xf32>
    %116 = arith.mulf %109, %115 : vector<4x32xf32>
    %117 = vector.extract_strided_slice %114 {offsets = [0, 0], sizes = [2, 32], strides = [1, 1]} : vector<4x32xf32> to vector<2x32xf32>
    %118 = vector.extract_strided_slice %114 {offsets = [2, 0], sizes = [2, 32], strides = [1, 1]} : vector<4x32xf32> to vector<2x32xf32>
    %119 = tpu.concatenate %114, %114 in 1 : vector<4x32xf32>, vector<4x32xf32> -> vector<4x64xf32>
    %120 = arith.mulf %119, %14 : vector<4x64xf32>
    %121 = vector.extract_strided_slice %30 {offsets = [6, 0], sizes = [2, 128], strides = [1, 1]} : vector<16x256xf32> to vector<2x128xf32>
    %122 = vector.extract_strided_slice %30 {offsets = [8, 128], sizes = [2, 128], strides = [1, 1]} : vector<16x256xf32> to vector<2x128xf32>
    %123 = tpu.concatenate %121, %122 in 0 : vector<2x128xf32>, vector<2x128xf32> -> vector<4x128xf32>
    %cst_24 = arith.constant dense<0.000000e+00> : vector<4x128xf32>
    %124 = tpu.matmul %120, %31, %cst_24 {dimension_numbers = #tpu.dot_dimension_numbers<[1], [0], [0], [1], [0, 0, 1, 1], [], []>} : vector<4x64xf32>, vector<64x128xf32>, vector<4x128xf32> -> vector<4x128xf32>
    %125 = arith.addf %123, %124 : vector<4x128xf32>
    %126 = arith.negf %125 : vector<4x128xf32>
    %127 = math.exp %126 : vector<4x128xf32>
    %cst_25 = arith.constant 1.000000e+00 : f32
    %128 = vector.broadcast %cst_25 : f32 to vector<4x128xf32>
    %129 = arith.addf %128, %127 : vector<4x128xf32>
    %130 = arith.divf %128, %129 : vector<4x128xf32>
    %131 = math.tanh %125 : vector<4x128xf32>
    %132 = vector.extract_strided_slice %130 {offsets = [0, 0], sizes = [4, 32], strides = [1, 1]} : vector<4x128xf32> to vector<4x32xf32>
    %133 = vector.extract_strided_slice %130 {offsets = [0, 32], sizes = [4, 32], strides = [1, 1]} : vector<4x128xf32> to vector<4x32xf32>
    %134 = vector.extract_strided_slice %131 {offsets = [0, 64], sizes = [4, 32], strides = [1, 1]} : vector<4x128xf32> to vector<4x32xf32>
    %135 = vector.extract_strided_slice %130 {offsets = [0, 96], sizes = [4, 32], strides = [1, 1]} : vector<4x128xf32> to vector<4x32xf32>
    %136 = arith.mulf %133, %116 : vector<4x32xf32>
    %137 = arith.mulf %132, %134 : vector<4x32xf32>
    %138 = arith.addf %136, %137 : vector<4x32xf32>
    %139 = math.tanh %138 : vector<4x32xf32>
    %140 = arith.mulf %135, %139 : vector<4x32xf32>
    %141 = vector.extract_strided_slice %15 {offsets = [0, 3], sizes = [4, 1], strides = [1, 1]} : vector<4x8xf32> to vector<4x1xf32>
    %142 = vector.broadcast %141 : vector<4x1xf32> to vector<4x32xf32>
    %143 = arith.mulf %140, %142 : vector<4x32xf32>
    %144 = vector.broadcast %141 : vector<4x1xf32> to vector<4x32xf32>
    %145 = arith.mulf %138, %144 : vector<4x32xf32>
    %146 = vector.extract_strided_slice %143 {offsets = [0, 0], sizes = [2, 32], strides = [1, 1]} : vector<4x32xf32> to vector<2x32xf32>
    %147 = vector.extract_strided_slice %143 {offsets = [2, 0], sizes = [2, 32], strides = [1, 1]} : vector<4x32xf32> to vector<2x32xf32>
    %148 = tpu.concatenate %143, %143 in 1 : vector<4x32xf32>, vector<4x32xf32> -> vector<4x64xf32>
    %149 = arith.mulf %148, %14 : vector<4x64xf32>
    %150 = vector.extract_strided_slice %30 {offsets = [8, 0], sizes = [2, 128], strides = [1, 1]} : vector<16x256xf32> to vector<2x128xf32>
    %151 = vector.extract_strided_slice %30 {offsets = [6, 128], sizes = [2, 128], strides = [1, 1]} : vector<16x256xf32> to vector<2x128xf32>
    %152 = tpu.concatenate %150, %151 in 0 : vector<2x128xf32>, vector<2x128xf32> -> vector<4x128xf32>
    %cst_26 = arith.constant dense<0.000000e+00> : vector<4x128xf32>
    %153 = tpu.matmul %149, %31, %cst_26 {dimension_numbers = #tpu.dot_dimension_numbers<[1], [0], [0], [1], [0, 0, 1, 1], [], []>} : vector<4x64xf32>, vector<64x128xf32>, vector<4x128xf32> -> vector<4x128xf32>
    %154 = arith.addf %152, %153 : vector<4x128xf32>
    %155 = arith.negf %154 : vector<4x128xf32>
    %156 = math.exp %155 : vector<4x128xf32>
    %cst_27 = arith.constant 1.000000e+00 : f32
    %157 = vector.broadcast %cst_27 : f32 to vector<4x128xf32>
    %158 = arith.addf %157, %156 : vector<4x128xf32>
    %159 = arith.divf %157, %158 : vector<4x128xf32>
    %160 = math.tanh %154 : vector<4x128xf32>
    %161 = vector.extract_strided_slice %159 {offsets = [0, 0], sizes = [4, 32], strides = [1, 1]} : vector<4x128xf32> to vector<4x32xf32>
    %162 = vector.extract_strided_slice %159 {offsets = [0, 32], sizes = [4, 32], strides = [1, 1]} : vector<4x128xf32> to vector<4x32xf32>
    %163 = vector.extract_strided_slice %160 {offsets = [0, 64], sizes = [4, 32], strides = [1, 1]} : vector<4x128xf32> to vector<4x32xf32>
    %164 = vector.extract_strided_slice %159 {offsets = [0, 96], sizes = [4, 32], strides = [1, 1]} : vector<4x128xf32> to vector<4x32xf32>
    %165 = arith.mulf %162, %145 : vector<4x32xf32>
    %166 = arith.mulf %161, %163 : vector<4x32xf32>
    %167 = arith.addf %165, %166 : vector<4x32xf32>
    %168 = math.tanh %167 : vector<4x32xf32>
    %169 = arith.mulf %164, %168 : vector<4x32xf32>
    %170 = vector.extract_strided_slice %15 {offsets = [0, 4], sizes = [4, 1], strides = [1, 1]} : vector<4x8xf32> to vector<4x1xf32>
    %171 = vector.broadcast %170 : vector<4x1xf32> to vector<4x32xf32>
    %172 = arith.mulf %169, %171 : vector<4x32xf32>
    %173 = vector.broadcast %170 : vector<4x1xf32> to vector<4x32xf32>
    %174 = arith.mulf %167, %173 : vector<4x32xf32>
    %175 = vector.extract_strided_slice %172 {offsets = [0, 0], sizes = [2, 32], strides = [1, 1]} : vector<4x32xf32> to vector<2x32xf32>
    %176 = vector.extract_strided_slice %172 {offsets = [2, 0], sizes = [2, 32], strides = [1, 1]} : vector<4x32xf32> to vector<2x32xf32>
    %177 = tpu.concatenate %172, %172 in 1 : vector<4x32xf32>, vector<4x32xf32> -> vector<4x64xf32>
    %178 = arith.mulf %177, %14 : vector<4x64xf32>
    %179 = vector.extract_strided_slice %30 {offsets = [10, 0], sizes = [2, 128], strides = [1, 1]} : vector<16x256xf32> to vector<2x128xf32>
    %180 = vector.extract_strided_slice %30 {offsets = [4, 128], sizes = [2, 128], strides = [1, 1]} : vector<16x256xf32> to vector<2x128xf32>
    %181 = tpu.concatenate %179, %180 in 0 : vector<2x128xf32>, vector<2x128xf32> -> vector<4x128xf32>
    %cst_28 = arith.constant dense<0.000000e+00> : vector<4x128xf32>
    %182 = tpu.matmul %178, %31, %cst_28 {dimension_numbers = #tpu.dot_dimension_numbers<[1], [0], [0], [1], [0, 0, 1, 1], [], []>} : vector<4x64xf32>, vector<64x128xf32>, vector<4x128xf32> -> vector<4x128xf32>
    %183 = arith.addf %181, %182 : vector<4x128xf32>
    %184 = arith.negf %183 : vector<4x128xf32>
    %185 = math.exp %184 : vector<4x128xf32>
    %cst_29 = arith.constant 1.000000e+00 : f32
    %186 = vector.broadcast %cst_29 : f32 to vector<4x128xf32>
    %187 = arith.addf %186, %185 : vector<4x128xf32>
    %188 = arith.divf %186, %187 : vector<4x128xf32>
    %189 = math.tanh %183 : vector<4x128xf32>
    %190 = vector.extract_strided_slice %188 {offsets = [0, 0], sizes = [4, 32], strides = [1, 1]} : vector<4x128xf32> to vector<4x32xf32>
    %191 = vector.extract_strided_slice %188 {offsets = [0, 32], sizes = [4, 32], strides = [1, 1]} : vector<4x128xf32> to vector<4x32xf32>
    %192 = vector.extract_strided_slice %189 {offsets = [0, 64], sizes = [4, 32], strides = [1, 1]} : vector<4x128xf32> to vector<4x32xf32>
    %193 = vector.extract_strided_slice %188 {offsets = [0, 96], sizes = [4, 32], strides = [1, 1]} : vector<4x128xf32> to vector<4x32xf32>
    %194 = arith.mulf %191, %174 : vector<4x32xf32>
    %195 = arith.mulf %190, %192 : vector<4x32xf32>
    %196 = arith.addf %194, %195 : vector<4x32xf32>
    %197 = math.tanh %196 : vector<4x32xf32>
    %198 = arith.mulf %193, %197 : vector<4x32xf32>
    %199 = vector.extract_strided_slice %15 {offsets = [0, 5], sizes = [4, 1], strides = [1, 1]} : vector<4x8xf32> to vector<4x1xf32>
    %200 = vector.broadcast %199 : vector<4x1xf32> to vector<4x32xf32>
    %201 = arith.mulf %198, %200 : vector<4x32xf32>
    %202 = vector.broadcast %199 : vector<4x1xf32> to vector<4x32xf32>
    %203 = arith.mulf %196, %202 : vector<4x32xf32>
    %204 = vector.extract_strided_slice %201 {offsets = [0, 0], sizes = [2, 32], strides = [1, 1]} : vector<4x32xf32> to vector<2x32xf32>
    %205 = vector.extract_strided_slice %201 {offsets = [2, 0], sizes = [2, 32], strides = [1, 1]} : vector<4x32xf32> to vector<2x32xf32>
    %206 = tpu.concatenate %201, %201 in 1 : vector<4x32xf32>, vector<4x32xf32> -> vector<4x64xf32>
    %207 = arith.mulf %206, %14 : vector<4x64xf32>
    %208 = vector.extract_strided_slice %30 {offsets = [12, 0], sizes = [2, 128], strides = [1, 1]} : vector<16x256xf32> to vector<2x128xf32>
    %209 = vector.extract_strided_slice %30 {offsets = [2, 128], sizes = [2, 128], strides = [1, 1]} : vector<16x256xf32> to vector<2x128xf32>
    %210 = tpu.concatenate %208, %209 in 0 : vector<2x128xf32>, vector<2x128xf32> -> vector<4x128xf32>
    %cst_30 = arith.constant dense<0.000000e+00> : vector<4x128xf32>
    %211 = tpu.matmul %207, %31, %cst_30 {dimension_numbers = #tpu.dot_dimension_numbers<[1], [0], [0], [1], [0, 0, 1, 1], [], []>} : vector<4x64xf32>, vector<64x128xf32>, vector<4x128xf32> -> vector<4x128xf32>
    %212 = arith.addf %210, %211 : vector<4x128xf32>
    %213 = arith.negf %212 : vector<4x128xf32>
    %214 = math.exp %213 : vector<4x128xf32>
    %cst_31 = arith.constant 1.000000e+00 : f32
    %215 = vector.broadcast %cst_31 : f32 to vector<4x128xf32>
    %216 = arith.addf %215, %214 : vector<4x128xf32>
    %217 = arith.divf %215, %216 : vector<4x128xf32>
    %218 = math.tanh %212 : vector<4x128xf32>
    %219 = vector.extract_strided_slice %217 {offsets = [0, 0], sizes = [4, 32], strides = [1, 1]} : vector<4x128xf32> to vector<4x32xf32>
    %220 = vector.extract_strided_slice %217 {offsets = [0, 32], sizes = [4, 32], strides = [1, 1]} : vector<4x128xf32> to vector<4x32xf32>
    %221 = vector.extract_strided_slice %218 {offsets = [0, 64], sizes = [4, 32], strides = [1, 1]} : vector<4x128xf32> to vector<4x32xf32>
    %222 = vector.extract_strided_slice %217 {offsets = [0, 96], sizes = [4, 32], strides = [1, 1]} : vector<4x128xf32> to vector<4x32xf32>
    %223 = arith.mulf %220, %203 : vector<4x32xf32>
    %224 = arith.mulf %219, %221 : vector<4x32xf32>
    %225 = arith.addf %223, %224 : vector<4x32xf32>
    %226 = math.tanh %225 : vector<4x32xf32>
    %227 = arith.mulf %222, %226 : vector<4x32xf32>
    %228 = vector.extract_strided_slice %15 {offsets = [0, 6], sizes = [4, 1], strides = [1, 1]} : vector<4x8xf32> to vector<4x1xf32>
    %229 = vector.broadcast %228 : vector<4x1xf32> to vector<4x32xf32>
    %230 = arith.mulf %227, %229 : vector<4x32xf32>
    %231 = vector.broadcast %228 : vector<4x1xf32> to vector<4x32xf32>
    %232 = arith.mulf %225, %231 : vector<4x32xf32>
    %233 = vector.extract_strided_slice %230 {offsets = [0, 0], sizes = [2, 32], strides = [1, 1]} : vector<4x32xf32> to vector<2x32xf32>
    %234 = vector.extract_strided_slice %230 {offsets = [2, 0], sizes = [2, 32], strides = [1, 1]} : vector<4x32xf32> to vector<2x32xf32>
    %235 = tpu.concatenate %230, %230 in 1 : vector<4x32xf32>, vector<4x32xf32> -> vector<4x64xf32>
    %236 = arith.mulf %235, %14 : vector<4x64xf32>
    %237 = vector.extract_strided_slice %30 {offsets = [14, 0], sizes = [2, 128], strides = [1, 1]} : vector<16x256xf32> to vector<2x128xf32>
    %238 = vector.extract_strided_slice %30 {offsets = [0, 128], sizes = [2, 128], strides = [1, 1]} : vector<16x256xf32> to vector<2x128xf32>
    %239 = tpu.concatenate %237, %238 in 0 : vector<2x128xf32>, vector<2x128xf32> -> vector<4x128xf32>
    %cst_32 = arith.constant dense<0.000000e+00> : vector<4x128xf32>
    %240 = tpu.matmul %236, %31, %cst_32 {dimension_numbers = #tpu.dot_dimension_numbers<[1], [0], [0], [1], [0, 0, 1, 1], [], []>} : vector<4x64xf32>, vector<64x128xf32>, vector<4x128xf32> -> vector<4x128xf32>
    %241 = arith.addf %239, %240 : vector<4x128xf32>
    %242 = arith.negf %241 : vector<4x128xf32>
    %243 = math.exp %242 : vector<4x128xf32>
    %cst_33 = arith.constant 1.000000e+00 : f32
    %244 = vector.broadcast %cst_33 : f32 to vector<4x128xf32>
    %245 = arith.addf %244, %243 : vector<4x128xf32>
    %246 = arith.divf %244, %245 : vector<4x128xf32>
    %247 = math.tanh %241 : vector<4x128xf32>
    %248 = vector.extract_strided_slice %246 {offsets = [0, 0], sizes = [4, 32], strides = [1, 1]} : vector<4x128xf32> to vector<4x32xf32>
    %249 = vector.extract_strided_slice %246 {offsets = [0, 32], sizes = [4, 32], strides = [1, 1]} : vector<4x128xf32> to vector<4x32xf32>
    %250 = vector.extract_strided_slice %247 {offsets = [0, 64], sizes = [4, 32], strides = [1, 1]} : vector<4x128xf32> to vector<4x32xf32>
    %251 = vector.extract_strided_slice %246 {offsets = [0, 96], sizes = [4, 32], strides = [1, 1]} : vector<4x128xf32> to vector<4x32xf32>
    %252 = arith.mulf %249, %232 : vector<4x32xf32>
    %253 = arith.mulf %248, %250 : vector<4x32xf32>
    %254 = arith.addf %252, %253 : vector<4x32xf32>
    %255 = math.tanh %254 : vector<4x32xf32>
    %256 = arith.mulf %251, %255 : vector<4x32xf32>
    %257 = vector.extract_strided_slice %15 {offsets = [0, 7], sizes = [4, 1], strides = [1, 1]} : vector<4x8xf32> to vector<4x1xf32>
    %258 = vector.broadcast %257 : vector<4x1xf32> to vector<4x32xf32>
    %259 = arith.mulf %256, %258 : vector<4x32xf32>
    %260 = vector.extract_strided_slice %259 {offsets = [0, 0], sizes = [2, 32], strides = [1, 1]} : vector<4x32xf32> to vector<2x32xf32>
    %261 = vector.extract_strided_slice %259 {offsets = [2, 0], sizes = [2, 32], strides = [1, 1]} : vector<4x32xf32> to vector<2x32xf32>
    %262 = tpu.concatenate %59, %88, %117, %146, %175, %204, %233, %260 in 0 : vector<2x32xf32>, vector<2x32xf32>, vector<2x32xf32>, vector<2x32xf32>, vector<2x32xf32>, vector<2x32xf32>, vector<2x32xf32>, vector<2x32xf32> -> vector<16x32xf32>
    %263 = tpu.concatenate %261, %234, %205, %176, %147, %118, %89, %60 in 0 : vector<2x32xf32>, vector<2x32xf32>, vector<2x32xf32>, vector<2x32xf32>, vector<2x32xf32>, vector<2x32xf32>, vector<2x32xf32>, vector<2x32xf32> -> vector<16x32xf32>
    %264 = tpu.concatenate %262, %263 in 1 : vector<16x32xf32>, vector<16x32xf32> -> vector<16x64xf32>
    %c0_34 = arith.constant 0 : index
    %c0_35 = arith.constant 0 : index
    %265 = vector.load %arg7[%c0_34, %c0_35] : memref<64x256xf32, #tpu.memory_space<vmem>>, vector<64x256xf32>
    %cst_36 = arith.constant dense<0.000000e+00> : vector<16x256xf32>
    %266 = tpu.matmul %264, %265, %cst_36 {dimension_numbers = #tpu.dot_dimension_numbers<[1], [0], [0], [1], [0, 0, 1, 1], [], []>} : vector<16x64xf32>, vector<64x256xf32>, vector<16x256xf32> -> vector<16x256xf32>
    %c0_37 = arith.constant 0 : index
    %c0_38 = arith.constant 0 : index
    %267 = vector.load %arg8[%c0_37, %c0_38] : memref<1x256xf32, #tpu.memory_space<vmem>>, vector<1x256xf32>
    %268 = vector.broadcast %267 : vector<1x256xf32> to vector<16x256xf32>
    %269 = arith.addf %266, %268 : vector<16x256xf32>
    %c0_39 = arith.constant 0 : index
    %c0_40 = arith.constant 0 : index
    %270 = vector.load %arg9[%c0_39, %c0_40] : memref<64x128xf32, #tpu.memory_space<vmem>>, vector<64x128xf32>
    %cst_41 = arith.constant 0.000000e+00 : f32
    %271 = vector.broadcast %cst_41 : f32 to vector<4x64xf32>
    %cst_42 = arith.constant 0.000000e+00 : f32
    %272 = vector.broadcast %cst_42 : f32 to vector<4x32xf32>
    %273 = vector.extract_strided_slice %269 {offsets = [0, 0], sizes = [2, 128], strides = [1, 1]} : vector<16x256xf32> to vector<2x128xf32>
    %274 = vector.extract_strided_slice %269 {offsets = [14, 128], sizes = [2, 128], strides = [1, 1]} : vector<16x256xf32> to vector<2x128xf32>
    %275 = tpu.concatenate %273, %274 in 0 : vector<2x128xf32>, vector<2x128xf32> -> vector<4x128xf32>
    %cst_43 = arith.constant dense<0.000000e+00> : vector<4x128xf32>
    %276 = tpu.matmul %271, %270, %cst_43 {dimension_numbers = #tpu.dot_dimension_numbers<[1], [0], [0], [1], [0, 0, 1, 1], [], []>} : vector<4x64xf32>, vector<64x128xf32>, vector<4x128xf32> -> vector<4x128xf32>
    %277 = arith.addf %275, %276 : vector<4x128xf32>
    %278 = arith.negf %277 : vector<4x128xf32>
    %279 = math.exp %278 : vector<4x128xf32>
    %cst_44 = arith.constant 1.000000e+00 : f32
    %280 = vector.broadcast %cst_44 : f32 to vector<4x128xf32>
    %281 = arith.addf %280, %279 : vector<4x128xf32>
    %282 = arith.divf %280, %281 : vector<4x128xf32>
    %283 = math.tanh %277 : vector<4x128xf32>
    %284 = vector.extract_strided_slice %282 {offsets = [0, 0], sizes = [4, 32], strides = [1, 1]} : vector<4x128xf32> to vector<4x32xf32>
    %285 = vector.extract_strided_slice %282 {offsets = [0, 32], sizes = [4, 32], strides = [1, 1]} : vector<4x128xf32> to vector<4x32xf32>
    %286 = vector.extract_strided_slice %283 {offsets = [0, 64], sizes = [4, 32], strides = [1, 1]} : vector<4x128xf32> to vector<4x32xf32>
    %287 = vector.extract_strided_slice %282 {offsets = [0, 96], sizes = [4, 32], strides = [1, 1]} : vector<4x128xf32> to vector<4x32xf32>
    %288 = arith.mulf %285, %272 : vector<4x32xf32>
    %289 = arith.mulf %284, %286 : vector<4x32xf32>
    %290 = arith.addf %288, %289 : vector<4x32xf32>
    %291 = math.tanh %290 : vector<4x32xf32>
    %292 = arith.mulf %287, %291 : vector<4x32xf32>
    %293 = vector.extract_strided_slice %15 {offsets = [0, 0], sizes = [4, 1], strides = [1, 1]} : vector<4x8xf32> to vector<4x1xf32>
    %294 = vector.broadcast %293 : vector<4x1xf32> to vector<4x32xf32>
    %295 = arith.mulf %292, %294 : vector<4x32xf32>
    %296 = vector.broadcast %293 : vector<4x1xf32> to vector<4x32xf32>
    %297 = arith.mulf %290, %296 : vector<4x32xf32>
    %298 = vector.extract_strided_slice %295 {offsets = [0, 0], sizes = [2, 32], strides = [1, 1]} : vector<4x32xf32> to vector<2x32xf32>
    %299 = vector.extract_strided_slice %295 {offsets = [2, 0], sizes = [2, 32], strides = [1, 1]} : vector<4x32xf32> to vector<2x32xf32>
    %300 = tpu.concatenate %295, %295 in 1 : vector<4x32xf32>, vector<4x32xf32> -> vector<4x64xf32>
    %301 = arith.mulf %300, %14 : vector<4x64xf32>
    %302 = vector.extract_strided_slice %269 {offsets = [2, 0], sizes = [2, 128], strides = [1, 1]} : vector<16x256xf32> to vector<2x128xf32>
    %303 = vector.extract_strided_slice %269 {offsets = [12, 128], sizes = [2, 128], strides = [1, 1]} : vector<16x256xf32> to vector<2x128xf32>
    %304 = tpu.concatenate %302, %303 in 0 : vector<2x128xf32>, vector<2x128xf32> -> vector<4x128xf32>
    %cst_45 = arith.constant dense<0.000000e+00> : vector<4x128xf32>
    %305 = tpu.matmul %301, %270, %cst_45 {dimension_numbers = #tpu.dot_dimension_numbers<[1], [0], [0], [1], [0, 0, 1, 1], [], []>} : vector<4x64xf32>, vector<64x128xf32>, vector<4x128xf32> -> vector<4x128xf32>
    %306 = arith.addf %304, %305 : vector<4x128xf32>
    %307 = arith.negf %306 : vector<4x128xf32>
    %308 = math.exp %307 : vector<4x128xf32>
    %cst_46 = arith.constant 1.000000e+00 : f32
    %309 = vector.broadcast %cst_46 : f32 to vector<4x128xf32>
    %310 = arith.addf %309, %308 : vector<4x128xf32>
    %311 = arith.divf %309, %310 : vector<4x128xf32>
    %312 = math.tanh %306 : vector<4x128xf32>
    %313 = vector.extract_strided_slice %311 {offsets = [0, 0], sizes = [4, 32], strides = [1, 1]} : vector<4x128xf32> to vector<4x32xf32>
    %314 = vector.extract_strided_slice %311 {offsets = [0, 32], sizes = [4, 32], strides = [1, 1]} : vector<4x128xf32> to vector<4x32xf32>
    %315 = vector.extract_strided_slice %312 {offsets = [0, 64], sizes = [4, 32], strides = [1, 1]} : vector<4x128xf32> to vector<4x32xf32>
    %316 = vector.extract_strided_slice %311 {offsets = [0, 96], sizes = [4, 32], strides = [1, 1]} : vector<4x128xf32> to vector<4x32xf32>
    %317 = arith.mulf %314, %297 : vector<4x32xf32>
    %318 = arith.mulf %313, %315 : vector<4x32xf32>
    %319 = arith.addf %317, %318 : vector<4x32xf32>
    %320 = math.tanh %319 : vector<4x32xf32>
    %321 = arith.mulf %316, %320 : vector<4x32xf32>
    %322 = vector.extract_strided_slice %15 {offsets = [0, 1], sizes = [4, 1], strides = [1, 1]} : vector<4x8xf32> to vector<4x1xf32>
    %323 = vector.broadcast %322 : vector<4x1xf32> to vector<4x32xf32>
    %324 = arith.mulf %321, %323 : vector<4x32xf32>
    %325 = vector.broadcast %322 : vector<4x1xf32> to vector<4x32xf32>
    %326 = arith.mulf %319, %325 : vector<4x32xf32>
    %327 = vector.extract_strided_slice %324 {offsets = [0, 0], sizes = [2, 32], strides = [1, 1]} : vector<4x32xf32> to vector<2x32xf32>
    %328 = vector.extract_strided_slice %324 {offsets = [2, 0], sizes = [2, 32], strides = [1, 1]} : vector<4x32xf32> to vector<2x32xf32>
    %329 = tpu.concatenate %324, %324 in 1 : vector<4x32xf32>, vector<4x32xf32> -> vector<4x64xf32>
    %330 = arith.mulf %329, %14 : vector<4x64xf32>
    %331 = vector.extract_strided_slice %269 {offsets = [4, 0], sizes = [2, 128], strides = [1, 1]} : vector<16x256xf32> to vector<2x128xf32>
    %332 = vector.extract_strided_slice %269 {offsets = [10, 128], sizes = [2, 128], strides = [1, 1]} : vector<16x256xf32> to vector<2x128xf32>
    %333 = tpu.concatenate %331, %332 in 0 : vector<2x128xf32>, vector<2x128xf32> -> vector<4x128xf32>
    %cst_47 = arith.constant dense<0.000000e+00> : vector<4x128xf32>
    %334 = tpu.matmul %330, %270, %cst_47 {dimension_numbers = #tpu.dot_dimension_numbers<[1], [0], [0], [1], [0, 0, 1, 1], [], []>} : vector<4x64xf32>, vector<64x128xf32>, vector<4x128xf32> -> vector<4x128xf32>
    %335 = arith.addf %333, %334 : vector<4x128xf32>
    %336 = arith.negf %335 : vector<4x128xf32>
    %337 = math.exp %336 : vector<4x128xf32>
    %cst_48 = arith.constant 1.000000e+00 : f32
    %338 = vector.broadcast %cst_48 : f32 to vector<4x128xf32>
    %339 = arith.addf %338, %337 : vector<4x128xf32>
    %340 = arith.divf %338, %339 : vector<4x128xf32>
    %341 = math.tanh %335 : vector<4x128xf32>
    %342 = vector.extract_strided_slice %340 {offsets = [0, 0], sizes = [4, 32], strides = [1, 1]} : vector<4x128xf32> to vector<4x32xf32>
    %343 = vector.extract_strided_slice %340 {offsets = [0, 32], sizes = [4, 32], strides = [1, 1]} : vector<4x128xf32> to vector<4x32xf32>
    %344 = vector.extract_strided_slice %341 {offsets = [0, 64], sizes = [4, 32], strides = [1, 1]} : vector<4x128xf32> to vector<4x32xf32>
    %345 = vector.extract_strided_slice %340 {offsets = [0, 96], sizes = [4, 32], strides = [1, 1]} : vector<4x128xf32> to vector<4x32xf32>
    %346 = arith.mulf %343, %326 : vector<4x32xf32>
    %347 = arith.mulf %342, %344 : vector<4x32xf32>
    %348 = arith.addf %346, %347 : vector<4x32xf32>
    %349 = math.tanh %348 : vector<4x32xf32>
    %350 = arith.mulf %345, %349 : vector<4x32xf32>
    %351 = vector.extract_strided_slice %15 {offsets = [0, 2], sizes = [4, 1], strides = [1, 1]} : vector<4x8xf32> to vector<4x1xf32>
    %352 = vector.broadcast %351 : vector<4x1xf32> to vector<4x32xf32>
    %353 = arith.mulf %350, %352 : vector<4x32xf32>
    %354 = vector.broadcast %351 : vector<4x1xf32> to vector<4x32xf32>
    %355 = arith.mulf %348, %354 : vector<4x32xf32>
    %356 = vector.extract_strided_slice %353 {offsets = [0, 0], sizes = [2, 32], strides = [1, 1]} : vector<4x32xf32> to vector<2x32xf32>
    %357 = vector.extract_strided_slice %353 {offsets = [2, 0], sizes = [2, 32], strides = [1, 1]} : vector<4x32xf32> to vector<2x32xf32>
    %358 = tpu.concatenate %353, %353 in 1 : vector<4x32xf32>, vector<4x32xf32> -> vector<4x64xf32>
    %359 = arith.mulf %358, %14 : vector<4x64xf32>
    %360 = vector.extract_strided_slice %269 {offsets = [6, 0], sizes = [2, 128], strides = [1, 1]} : vector<16x256xf32> to vector<2x128xf32>
    %361 = vector.extract_strided_slice %269 {offsets = [8, 128], sizes = [2, 128], strides = [1, 1]} : vector<16x256xf32> to vector<2x128xf32>
    %362 = tpu.concatenate %360, %361 in 0 : vector<2x128xf32>, vector<2x128xf32> -> vector<4x128xf32>
    %cst_49 = arith.constant dense<0.000000e+00> : vector<4x128xf32>
    %363 = tpu.matmul %359, %270, %cst_49 {dimension_numbers = #tpu.dot_dimension_numbers<[1], [0], [0], [1], [0, 0, 1, 1], [], []>} : vector<4x64xf32>, vector<64x128xf32>, vector<4x128xf32> -> vector<4x128xf32>
    %364 = arith.addf %362, %363 : vector<4x128xf32>
    %365 = arith.negf %364 : vector<4x128xf32>
    %366 = math.exp %365 : vector<4x128xf32>
    %cst_50 = arith.constant 1.000000e+00 : f32
    %367 = vector.broadcast %cst_50 : f32 to vector<4x128xf32>
    %368 = arith.addf %367, %366 : vector<4x128xf32>
    %369 = arith.divf %367, %368 : vector<4x128xf32>
    %370 = math.tanh %364 : vector<4x128xf32>
    %371 = vector.extract_strided_slice %369 {offsets = [0, 0], sizes = [4, 32], strides = [1, 1]} : vector<4x128xf32> to vector<4x32xf32>
    %372 = vector.extract_strided_slice %369 {offsets = [0, 32], sizes = [4, 32], strides = [1, 1]} : vector<4x128xf32> to vector<4x32xf32>
    %373 = vector.extract_strided_slice %370 {offsets = [0, 64], sizes = [4, 32], strides = [1, 1]} : vector<4x128xf32> to vector<4x32xf32>
    %374 = vector.extract_strided_slice %369 {offsets = [0, 96], sizes = [4, 32], strides = [1, 1]} : vector<4x128xf32> to vector<4x32xf32>
    %375 = arith.mulf %372, %355 : vector<4x32xf32>
    %376 = arith.mulf %371, %373 : vector<4x32xf32>
    %377 = arith.addf %375, %376 : vector<4x32xf32>
    %378 = math.tanh %377 : vector<4x32xf32>
    %379 = arith.mulf %374, %378 : vector<4x32xf32>
    %380 = vector.extract_strided_slice %15 {offsets = [0, 3], sizes = [4, 1], strides = [1, 1]} : vector<4x8xf32> to vector<4x1xf32>
    %381 = vector.broadcast %380 : vector<4x1xf32> to vector<4x32xf32>
    %382 = arith.mulf %379, %381 : vector<4x32xf32>
    %383 = vector.broadcast %380 : vector<4x1xf32> to vector<4x32xf32>
    %384 = arith.mulf %377, %383 : vector<4x32xf32>
    %385 = vector.extract_strided_slice %382 {offsets = [0, 0], sizes = [2, 32], strides = [1, 1]} : vector<4x32xf32> to vector<2x32xf32>
    %386 = vector.extract_strided_slice %382 {offsets = [2, 0], sizes = [2, 32], strides = [1, 1]} : vector<4x32xf32> to vector<2x32xf32>
    %387 = tpu.concatenate %382, %382 in 1 : vector<4x32xf32>, vector<4x32xf32> -> vector<4x64xf32>
    %388 = arith.mulf %387, %14 : vector<4x64xf32>
    %389 = vector.extract_strided_slice %269 {offsets = [8, 0], sizes = [2, 128], strides = [1, 1]} : vector<16x256xf32> to vector<2x128xf32>
    %390 = vector.extract_strided_slice %269 {offsets = [6, 128], sizes = [2, 128], strides = [1, 1]} : vector<16x256xf32> to vector<2x128xf32>
    %391 = tpu.concatenate %389, %390 in 0 : vector<2x128xf32>, vector<2x128xf32> -> vector<4x128xf32>
    %cst_51 = arith.constant dense<0.000000e+00> : vector<4x128xf32>
    %392 = tpu.matmul %388, %270, %cst_51 {dimension_numbers = #tpu.dot_dimension_numbers<[1], [0], [0], [1], [0, 0, 1, 1], [], []>} : vector<4x64xf32>, vector<64x128xf32>, vector<4x128xf32> -> vector<4x128xf32>
    %393 = arith.addf %391, %392 : vector<4x128xf32>
    %394 = arith.negf %393 : vector<4x128xf32>
    %395 = math.exp %394 : vector<4x128xf32>
    %cst_52 = arith.constant 1.000000e+00 : f32
    %396 = vector.broadcast %cst_52 : f32 to vector<4x128xf32>
    %397 = arith.addf %396, %395 : vector<4x128xf32>
    %398 = arith.divf %396, %397 : vector<4x128xf32>
    %399 = math.tanh %393 : vector<4x128xf32>
    %400 = vector.extract_strided_slice %398 {offsets = [0, 0], sizes = [4, 32], strides = [1, 1]} : vector<4x128xf32> to vector<4x32xf32>
    %401 = vector.extract_strided_slice %398 {offsets = [0, 32], sizes = [4, 32], strides = [1, 1]} : vector<4x128xf32> to vector<4x32xf32>
    %402 = vector.extract_strided_slice %399 {offsets = [0, 64], sizes = [4, 32], strides = [1, 1]} : vector<4x128xf32> to vector<4x32xf32>
    %403 = vector.extract_strided_slice %398 {offsets = [0, 96], sizes = [4, 32], strides = [1, 1]} : vector<4x128xf32> to vector<4x32xf32>
    %404 = arith.mulf %401, %384 : vector<4x32xf32>
    %405 = arith.mulf %400, %402 : vector<4x32xf32>
    %406 = arith.addf %404, %405 : vector<4x32xf32>
    %407 = math.tanh %406 : vector<4x32xf32>
    %408 = arith.mulf %403, %407 : vector<4x32xf32>
    %409 = vector.extract_strided_slice %15 {offsets = [0, 4], sizes = [4, 1], strides = [1, 1]} : vector<4x8xf32> to vector<4x1xf32>
    %410 = vector.broadcast %409 : vector<4x1xf32> to vector<4x32xf32>
    %411 = arith.mulf %408, %410 : vector<4x32xf32>
    %412 = vector.broadcast %409 : vector<4x1xf32> to vector<4x32xf32>
    %413 = arith.mulf %406, %412 : vector<4x32xf32>
    %414 = vector.extract_strided_slice %411 {offsets = [0, 0], sizes = [2, 32], strides = [1, 1]} : vector<4x32xf32> to vector<2x32xf32>
    %415 = vector.extract_strided_slice %411 {offsets = [2, 0], sizes = [2, 32], strides = [1, 1]} : vector<4x32xf32> to vector<2x32xf32>
    %416 = tpu.concatenate %411, %411 in 1 : vector<4x32xf32>, vector<4x32xf32> -> vector<4x64xf32>
    %417 = arith.mulf %416, %14 : vector<4x64xf32>
    %418 = vector.extract_strided_slice %269 {offsets = [10, 0], sizes = [2, 128], strides = [1, 1]} : vector<16x256xf32> to vector<2x128xf32>
    %419 = vector.extract_strided_slice %269 {offsets = [4, 128], sizes = [2, 128], strides = [1, 1]} : vector<16x256xf32> to vector<2x128xf32>
    %420 = tpu.concatenate %418, %419 in 0 : vector<2x128xf32>, vector<2x128xf32> -> vector<4x128xf32>
    %cst_53 = arith.constant dense<0.000000e+00> : vector<4x128xf32>
    %421 = tpu.matmul %417, %270, %cst_53 {dimension_numbers = #tpu.dot_dimension_numbers<[1], [0], [0], [1], [0, 0, 1, 1], [], []>} : vector<4x64xf32>, vector<64x128xf32>, vector<4x128xf32> -> vector<4x128xf32>
    %422 = arith.addf %420, %421 : vector<4x128xf32>
    %423 = arith.negf %422 : vector<4x128xf32>
    %424 = math.exp %423 : vector<4x128xf32>
    %cst_54 = arith.constant 1.000000e+00 : f32
    %425 = vector.broadcast %cst_54 : f32 to vector<4x128xf32>
    %426 = arith.addf %425, %424 : vector<4x128xf32>
    %427 = arith.divf %425, %426 : vector<4x128xf32>
    %428 = math.tanh %422 : vector<4x128xf32>
    %429 = vector.extract_strided_slice %427 {offsets = [0, 0], sizes = [4, 32], strides = [1, 1]} : vector<4x128xf32> to vector<4x32xf32>
    %430 = vector.extract_strided_slice %427 {offsets = [0, 32], sizes = [4, 32], strides = [1, 1]} : vector<4x128xf32> to vector<4x32xf32>
    %431 = vector.extract_strided_slice %428 {offsets = [0, 64], sizes = [4, 32], strides = [1, 1]} : vector<4x128xf32> to vector<4x32xf32>
    %432 = vector.extract_strided_slice %427 {offsets = [0, 96], sizes = [4, 32], strides = [1, 1]} : vector<4x128xf32> to vector<4x32xf32>
    %433 = arith.mulf %430, %413 : vector<4x32xf32>
    %434 = arith.mulf %429, %431 : vector<4x32xf32>
    %435 = arith.addf %433, %434 : vector<4x32xf32>
    %436 = math.tanh %435 : vector<4x32xf32>
    %437 = arith.mulf %432, %436 : vector<4x32xf32>
    %438 = vector.extract_strided_slice %15 {offsets = [0, 5], sizes = [4, 1], strides = [1, 1]} : vector<4x8xf32> to vector<4x1xf32>
    %439 = vector.broadcast %438 : vector<4x1xf32> to vector<4x32xf32>
    %440 = arith.mulf %437, %439 : vector<4x32xf32>
    %441 = vector.broadcast %438 : vector<4x1xf32> to vector<4x32xf32>
    %442 = arith.mulf %435, %441 : vector<4x32xf32>
    %443 = vector.extract_strided_slice %440 {offsets = [0, 0], sizes = [2, 32], strides = [1, 1]} : vector<4x32xf32> to vector<2x32xf32>
    %444 = vector.extract_strided_slice %440 {offsets = [2, 0], sizes = [2, 32], strides = [1, 1]} : vector<4x32xf32> to vector<2x32xf32>
    %445 = tpu.concatenate %440, %440 in 1 : vector<4x32xf32>, vector<4x32xf32> -> vector<4x64xf32>
    %446 = arith.mulf %445, %14 : vector<4x64xf32>
    %447 = vector.extract_strided_slice %269 {offsets = [12, 0], sizes = [2, 128], strides = [1, 1]} : vector<16x256xf32> to vector<2x128xf32>
    %448 = vector.extract_strided_slice %269 {offsets = [2, 128], sizes = [2, 128], strides = [1, 1]} : vector<16x256xf32> to vector<2x128xf32>
    %449 = tpu.concatenate %447, %448 in 0 : vector<2x128xf32>, vector<2x128xf32> -> vector<4x128xf32>
    %cst_55 = arith.constant dense<0.000000e+00> : vector<4x128xf32>
    %450 = tpu.matmul %446, %270, %cst_55 {dimension_numbers = #tpu.dot_dimension_numbers<[1], [0], [0], [1], [0, 0, 1, 1], [], []>} : vector<4x64xf32>, vector<64x128xf32>, vector<4x128xf32> -> vector<4x128xf32>
    %451 = arith.addf %449, %450 : vector<4x128xf32>
    %452 = arith.negf %451 : vector<4x128xf32>
    %453 = math.exp %452 : vector<4x128xf32>
    %cst_56 = arith.constant 1.000000e+00 : f32
    %454 = vector.broadcast %cst_56 : f32 to vector<4x128xf32>
    %455 = arith.addf %454, %453 : vector<4x128xf32>
    %456 = arith.divf %454, %455 : vector<4x128xf32>
    %457 = math.tanh %451 : vector<4x128xf32>
    %458 = vector.extract_strided_slice %456 {offsets = [0, 0], sizes = [4, 32], strides = [1, 1]} : vector<4x128xf32> to vector<4x32xf32>
    %459 = vector.extract_strided_slice %456 {offsets = [0, 32], sizes = [4, 32], strides = [1, 1]} : vector<4x128xf32> to vector<4x32xf32>
    %460 = vector.extract_strided_slice %457 {offsets = [0, 64], sizes = [4, 32], strides = [1, 1]} : vector<4x128xf32> to vector<4x32xf32>
    %461 = vector.extract_strided_slice %456 {offsets = [0, 96], sizes = [4, 32], strides = [1, 1]} : vector<4x128xf32> to vector<4x32xf32>
    %462 = arith.mulf %459, %442 : vector<4x32xf32>
    %463 = arith.mulf %458, %460 : vector<4x32xf32>
    %464 = arith.addf %462, %463 : vector<4x32xf32>
    %465 = math.tanh %464 : vector<4x32xf32>
    %466 = arith.mulf %461, %465 : vector<4x32xf32>
    %467 = vector.extract_strided_slice %15 {offsets = [0, 6], sizes = [4, 1], strides = [1, 1]} : vector<4x8xf32> to vector<4x1xf32>
    %468 = vector.broadcast %467 : vector<4x1xf32> to vector<4x32xf32>
    %469 = arith.mulf %466, %468 : vector<4x32xf32>
    %470 = vector.broadcast %467 : vector<4x1xf32> to vector<4x32xf32>
    %471 = arith.mulf %464, %470 : vector<4x32xf32>
    %472 = vector.extract_strided_slice %469 {offsets = [0, 0], sizes = [2, 32], strides = [1, 1]} : vector<4x32xf32> to vector<2x32xf32>
    %473 = vector.extract_strided_slice %469 {offsets = [2, 0], sizes = [2, 32], strides = [1, 1]} : vector<4x32xf32> to vector<2x32xf32>
    %474 = tpu.concatenate %469, %469 in 1 : vector<4x32xf32>, vector<4x32xf32> -> vector<4x64xf32>
    %475 = arith.mulf %474, %14 : vector<4x64xf32>
    %476 = vector.extract_strided_slice %269 {offsets = [14, 0], sizes = [2, 128], strides = [1, 1]} : vector<16x256xf32> to vector<2x128xf32>
    %477 = vector.extract_strided_slice %269 {offsets = [0, 128], sizes = [2, 128], strides = [1, 1]} : vector<16x256xf32> to vector<2x128xf32>
    %478 = tpu.concatenate %476, %477 in 0 : vector<2x128xf32>, vector<2x128xf32> -> vector<4x128xf32>
    %cst_57 = arith.constant dense<0.000000e+00> : vector<4x128xf32>
    %479 = tpu.matmul %475, %270, %cst_57 {dimension_numbers = #tpu.dot_dimension_numbers<[1], [0], [0], [1], [0, 0, 1, 1], [], []>} : vector<4x64xf32>, vector<64x128xf32>, vector<4x128xf32> -> vector<4x128xf32>
    %480 = arith.addf %478, %479 : vector<4x128xf32>
    %481 = arith.negf %480 : vector<4x128xf32>
    %482 = math.exp %481 : vector<4x128xf32>
    %cst_58 = arith.constant 1.000000e+00 : f32
    %483 = vector.broadcast %cst_58 : f32 to vector<4x128xf32>
    %484 = arith.addf %483, %482 : vector<4x128xf32>
    %485 = arith.divf %483, %484 : vector<4x128xf32>
    %486 = math.tanh %480 : vector<4x128xf32>
    %487 = vector.extract_strided_slice %485 {offsets = [0, 0], sizes = [4, 32], strides = [1, 1]} : vector<4x128xf32> to vector<4x32xf32>
    %488 = vector.extract_strided_slice %485 {offsets = [0, 32], sizes = [4, 32], strides = [1, 1]} : vector<4x128xf32> to vector<4x32xf32>
    %489 = vector.extract_strided_slice %486 {offsets = [0, 64], sizes = [4, 32], strides = [1, 1]} : vector<4x128xf32> to vector<4x32xf32>
    %490 = vector.extract_strided_slice %485 {offsets = [0, 96], sizes = [4, 32], strides = [1, 1]} : vector<4x128xf32> to vector<4x32xf32>
    %491 = arith.mulf %488, %471 : vector<4x32xf32>
    %492 = arith.mulf %487, %489 : vector<4x32xf32>
    %493 = arith.addf %491, %492 : vector<4x32xf32>
    %494 = math.tanh %493 : vector<4x32xf32>
    %495 = arith.mulf %490, %494 : vector<4x32xf32>
    %496 = vector.extract_strided_slice %15 {offsets = [0, 7], sizes = [4, 1], strides = [1, 1]} : vector<4x8xf32> to vector<4x1xf32>
    %497 = vector.broadcast %496 : vector<4x1xf32> to vector<4x32xf32>
    %498 = arith.mulf %495, %497 : vector<4x32xf32>
    %499 = vector.extract_strided_slice %498 {offsets = [0, 0], sizes = [2, 32], strides = [1, 1]} : vector<4x32xf32> to vector<2x32xf32>
    %500 = vector.extract_strided_slice %498 {offsets = [2, 0], sizes = [2, 32], strides = [1, 1]} : vector<4x32xf32> to vector<2x32xf32>
    %501 = tpu.concatenate %298, %327, %356, %385, %414, %443, %472, %499 in 0 : vector<2x32xf32>, vector<2x32xf32>, vector<2x32xf32>, vector<2x32xf32>, vector<2x32xf32>, vector<2x32xf32>, vector<2x32xf32>, vector<2x32xf32> -> vector<16x32xf32>
    %502 = tpu.concatenate %500, %473, %444, %415, %386, %357, %328, %299 in 0 : vector<2x32xf32>, vector<2x32xf32>, vector<2x32xf32>, vector<2x32xf32>, vector<2x32xf32>, vector<2x32xf32>, vector<2x32xf32>, vector<2x32xf32> -> vector<16x32xf32>
    %503 = tpu.concatenate %501, %502 in 1 : vector<16x32xf32>, vector<16x32xf32> -> vector<16x64xf32>
    %c0_59 = arith.constant 0 : index
    %c0_60 = arith.constant 0 : index
    %504 = vector.load %arg10[%c0_59, %c0_60] : memref<16x64xf32, #tpu.memory_space<vmem>>, vector<16x64xf32>
    tpu.vector_store %arg10[%c0_59, %c0_60], %503 {strides = array<i32>} : memref<16x64xf32, #tpu.memory_space<vmem>>, vector<16x64xf32>,
    return
  }
}

</mosaic_0001>

<llo_original>
// kernel: edu_encoder_forward.1
$region0: #{edu_encoder_forward.1}
  #allocation0 [shape = 'u32[]', space=smem, size = 0x4, offset = 0x4, fixed_abs, tag = 'smem constant byte address 0x4 - core index']
  #allocation1 [shape = 'u32[144,128]{1,0:T(1,128)}', space=vmem, size = 0x12000, scoped, tag = 'internal scratch']
  %s0 = inlined_call_operand.vmem [shape: f32[16,64], index: 0, kind: input, shape index: {}]
  %s1 = inlined_call_operand.vmem [shape: s32[16,1], index: 1, kind: input, shape index: {}]
  %s2 = inlined_call_operand.vmem [shape: f32[4,8], index: 2, kind: input, shape index: {}]
  %s3 = inlined_call_operand.vmem [shape: f32[64,256], index: 3, kind: input, shape index: {}]
  %s4 = inlined_call_operand.vmem [shape: f32[10,256], index: 4, kind: input, shape index: {}]
  %s5 = inlined_call_operand.vmem [shape: f32[1,256], index: 5, kind: input, shape index: {}]
  %s6 = inlined_call_operand.vmem [shape: f32[64,128], index: 6, kind: input, shape index: {}]
  %s7 = inlined_call_operand.vmem [shape: f32[64,256], index: 7, kind: input, shape index: {}]
  %s8 = inlined_call_operand.vmem [shape: f32[1,256], index: 8, kind: input, shape index: {}]
  %s9 = inlined_call_operand.vmem [shape: f32[64,128], index: 9, kind: input, shape index: {}]
  %s10 = inlined_call_operand.vmem [shape: f32[16,64], index: 10, kind: output, shape index: {}]
  %s11 = sld [smem:[#allocation0]]
  $region50: #{edu_encoder_forward.1} parent=0
    _
  %s13 = ssub.s32 1, %s11
  %s14 = scalar_select 0, %s13, %s11
  // Predicated region
  $region2: #{edu_encoder_forward.1} parent=0 // pred_check
    _
  $region3: #{edu_encoder_forward.1} parent=0 // pred_check_branch
    %16 = sbr.rel (0) target = $region5
  $region4: #{edu_encoder_forward.1} parent=0 // pred_region
    _
  $region5: #{edu_encoder_forward.1} parent=0 // pred_fallthru
    _
  // Predicated region
  $region6: #{edu_encoder_forward.1} parent=0 // pred_check
    _
  $region7: #{edu_encoder_forward.1} parent=0 // pred_check_branch
    %18 = sbr.rel (0) target = $region9
  $region8: #{edu_encoder_forward.1} parent=0 // pred_region
    _
  $region9: #{edu_encoder_forward.1} parent=0 // pred_fallthru
    _
  // Predicated region
  $region10: #{edu_encoder_forward.1} parent=0 // pred_check
    _
  $region11: #{edu_encoder_forward.1} parent=0 // pred_check_branch
    %20 = sbr.rel (0) target = $region13
  $region12: #{edu_encoder_forward.1} parent=0 // pred_region
    _
  $region13: #{edu_encoder_forward.1} parent=0 // pred_fallthru
    _
  // Predicated region
  $region14: #{edu_encoder_forward.1} parent=0 // pred_check
    _
  $region15: #{edu_encoder_forward.1} parent=0 // pred_check_branch
    %22 = sbr.rel (0) target = $region17
  $region16: #{edu_encoder_forward.1} parent=0 // pred_region
    _
  $region17: #{edu_encoder_forward.1} parent=0 // pred_fallthru
    _
  // Predicated region
  $region18: #{edu_encoder_forward.1} parent=0 // pred_check
    _
  $region19: #{edu_encoder_forward.1} parent=0 // pred_check_branch
    %24 = sbr.rel (0) target = $region21
  $region20: #{edu_encoder_forward.1} parent=0 // pred_region
    _
  $region21: #{edu_encoder_forward.1} parent=0 // pred_fallthru
    _
  // Predicated region
  $region22: #{edu_encoder_forward.1} parent=0 // pred_check
    _
  $region23: #{edu_encoder_forward.1} parent=0 // pred_check_branch
    %26 = sbr.rel (0) target = $region25
  $region24: #{edu_encoder_forward.1} parent=0 // pred_region
    _
  $region25: #{edu_encoder_forward.1} parent=0 // pred_fallthru
    _
  // Predicated region
  $region26: #{edu_encoder_forward.1} parent=0 // pred_check
    _
  $region27: #{edu_encoder_forward.1} parent=0 // pred_check_branch
    %28 = sbr.rel (0) target = $region29
  $region28: #{edu_encoder_forward.1} parent=0 // pred_region
    _
  $region29: #{edu_encoder_forward.1} parent=0 // pred_fallthru
    _
  // Predicated region
  $region30: #{edu_encoder_forward.1} parent=0 // pred_check
    _
  $region31: #{edu_encoder_forward.1} parent=0 // pred_check_branch
    %30 = sbr.rel (0) target = $region33
  $region32: #{edu_encoder_forward.1} parent=0 // pred_region
    _
  $region33: #{edu_encoder_forward.1} parent=0 // pred_fallthru
    _
  // Predicated region
  $region34: #{edu_encoder_forward.1} parent=0 // pred_check
    _
  $region35: #{edu_encoder_forward.1} parent=0 // pred_check_branch
    %32 = sbr.rel (0) target = $region37
  $region36: #{edu_encoder_forward.1} parent=0 // pred_region
    _
  $region37: #{edu_encoder_forward.1} parent=0 // pred_fallthru
    _
  // Predicated region
  $region38: #{edu_encoder_forward.1} parent=0 // pred_check
    _
  $region39: #{edu_encoder_forward.1} parent=0 // pred_check_branch
    %34 = sbr.rel (0) target = $region41
  $region40: #{edu_encoder_forward.1} parent=0 // pred_region
    _
  $region41: #{edu_encoder_forward.1} parent=0 // pred_fallthru
    _
  %v35 = vlaneseq
  %v36 = vshrl.u32 %v35, 7
  %v37 = vlaneseq
  %v38 = vand.u32 %v37, 127
  %vm39 = vcmp.lt.s32.totalorder %v36, 2
  %vm40 = vcmp.lt.s32.totalorder %v38, 32
  %vm41 = vmand %vm39, %vm40
  %vm42 = vcmp.ge.s32.totalorder %v36, 2
  %vm43 = vcmp.ge.s32.totalorder %v38, 32
  %vm44 = vmand %vm42, %vm43
  %vm45 = vmor %vm41, %vm44
  %v46 = vsel %vm45, 1, 0
  %v47 = vcvt.s32.f32 %v46
  %v48 = vld [vmem:[%s2] sm:$0xf]
  %v49 = vld [vmem:[%s1] sm:$0xff]
  %v50 = vld [vmem:[%s1 + $0x8] sm:$0xff]
  %51 = vset.pattern.permute.xlu0 0
  %52 = vperm.xlu0 %51, %v49
  %v53 = vpop.permute.xlu0 %52
  %54 = vset.pattern.permute.xlu0 0
  %55 = vperm.xlu0 %54, %v50
  %v56 = vpop.permute.xlu0 %55
  %vm57 = vcmp.eq.s32.totalorder %v38, %v53
  %vm58 = vcmp.eq.s32.totalorder %v38, %v56
  %v59 = vsel %vm57, 1, 0
  %v60 = vsel %vm58, 1, 0
  %v61 = vcvt.s32.f32 %v59
  %v62 = vcvt.s32.f32 %v60
  %v63 = vld [vmem:[%s0] sm:$0xff]
  %v64 = vld [vmem:[%s0 + $0x8] sm:$0xff]
  %v65 = vld [vmem:[%s3] sm:$0xff]
  %v66 = vld [vmem:[%s3 + $0x8] sm:$0xff]
  %v67 = vld [vmem:[%s3 + $0x10] sm:$0xff]
  %v68 = vld [vmem:[%s3 + $0x18] sm:$0xff]
  %v69 = vld [vmem:[%s3 + $0x20] sm:$0xff]
  %v70 = vld [vmem:[%s3 + $0x28] sm:$0xff]
  %v71 = vld [vmem:[%s3 + $0x30] sm:$0xff]
  %v72 = vld [vmem:[%s3 + $0x38] sm:$0xff]
  %v73 = vld [vmem:[%s3 + $0x40] sm:$0xff]
  %v74 = vld [vmem:[%s3 + $0x48] sm:$0xff]
  %v75 = vld [vmem:[%s3 + $0x50] sm:$0xff]
  %v76 = vld [vmem:[%s3 + $0x58] sm:$0xff]
  %v77 = vld [vmem:[%s3 + $0x60] sm:$0xff]
  %v78 = vld [vmem:[%s3 + $0x68] sm:$0xff]
  %v79 = vld [vmem:[%s3 + $0x70] sm:$0xff]
  %v80 = vld [vmem:[%s3 + $0x78] sm:$0xff]
  %v81 = vld [vmem:[%s4] sm:$0xff]
  %v82 = vld [vmem:[%s4 + $0x8] sm:$0xff]
  %v83 = vld [vmem:[%s4 + $0x10] sm:$0x3]
  %v84 = vld [vmem:[%s4 + $0x18] sm:$0x3]
  %vm85 = vcmask 80896
  %v87 = vsel %vm85, %v61, 0
  %v90 = vsel %vm85, %v62, 0
  %vm92 = vcmask 1041408
  %v94 = vsel %vm92, %v83, 0
  %v97 = vsel %vm92, %v84, 0
  %99 = vmatprep.subr.mxu0 %v82
  %100 = vmatpush1.msra.mxu0 %v81
  %101 = vmatprep.subr.mxu0 %v97
  %102 = vmatpush1.msra.mxu0 %v94
  %103 = vmatprep.subr.mxu0 0.0
  %104 = vmatpush1.msra.mxu0 0.0
  %105 = vmatprep.subr.mxu0 0.0
  %106 = vmatpush1.msra.mxu0 0.0
  %107 = vmatprep.subr.mxu0 0.0
  %108 = vmatpush1.msra.mxu0 0.0
  %109 = vmatprep.subr.mxu0 0.0
  %110 = vmatpush1.msra.mxu0 0.0
  %111 = vmatprep.subr.mxu0 0.0
  %112 = vmatpush1.msra.mxu0 0.0
  %113 = vmatprep.subr.mxu0 0.0
  %114 = vmatpush1.msra.mxu0 0.0
  %115 = vmatprep.subr.mxu0 0.0
  %116 = vmatpush1.msra.mxu0 0.0
  %117 = vmatprep.subr.mxu0 0.0
  %118 = vmatpush1.msra.mxu0 0.0
  %119 = vmatprep.subr.mxu0 0.0
  %120 = vmatpush1.msra.mxu0 0.0
  %121 = vmatprep.subr.mxu0 0.0
  %122 = vmatpush1.msra.mxu0 0.0
  %123 = vmatprep.subr.mxu0 0.0
  %124 = vmatpush1.msra.mxu0 0.0
  %125 = vmatprep.subr.mxu0 0.0
  %126 = vmatpush1.msra.mxu0 0.0
  %127 = vmatprep.subr.mxu0 0.0
  %128 = vmatpush1.msra.mxu0 0.0
  %129 = vmatprep.subr.mxu0 0.0
  %130 = vmatpush1.msra.mxu0 0.0
  %131 = vmatprep.subr.mxu0 0.0
  %132 = vmatpush1.msra.mxu0 0.0
  %133 = vmatprep.subr.mxu0 0.0
  %134 = vmatpush1.msra.mxu0 0.0
  %135 = vmatprep.subr.mxu0 0.0
  %136 = vmatpush1.msra.mxu0 0.0
  %137 = vmatprep.subr.mxu0 0.0
  %138 = vmatpush1.msra.mxu0 0.0
  %139 = vmatprep.subr.mxu0 0.0
  %140 = vmatpush1.msra.mxu0 0.0
  %141 = vmatprep.subr.mxu0 0.0
  %142 = vmatpush1.msra.mxu0 0.0
  %143 = vmatprep.subr.mxu0 0.0
  %144 = vmatpush1.msra.mxu0 0.0
  %145 = vmatprep.subr.mxu0 0.0
  %146 = vmatpush1.msra.mxu0 0.0
  %147 = vmatprep.subr.mxu0 0.0
  %148 = vmatpush1.msra.mxu0 0.0
  %149 = vmatprep.subr.mxu0 0.0
  %150 = vmatpush1.msra.mxu0 0.0
  %151 = vmatprep.subr.mxu0 0.0
  %152 = vmatpush1.msra.mxu0 0.0
  %153 = vmatprep.subr.mxu0 0.0
  %154 = vmatpush1.msra.mxu0 0.0
  %155 = vmatprep.subr.mxu0 0.0
  %156 = vmatpush1.msra.mxu0 0.0
  %157 = vmatprep.subr.mxu0 0.0
  %158 = vmatpush1.msra.mxu0 0.0
  %159 = vmatprep.subr.mxu0 0.0
  %160 = vmatpush1.msra.mxu0 0.0
  %161 = vmatprep.subr.mxu0 0.0
  %162 = vmatpush1.msra.mxu0 0.0
  %163 = vmatprep.mubr.f32.mxu0 0.0
  %164 = vmatmul.mubr.f32.gmra.mrb[0].mxu0 %v87
  %v165 = vpop.f32.mrb[0].mxu0
  %v166 = vadd.f32 0.0, %v165
  %v167 = vpop.f32.mrb[0].mxu0
  %v168 = vadd.f32 0.0, %v167
  %169 = vmatprep.mubr.f32.mxu0 0.0
  %170 = vmatmul.mubr.f32.gmra.mrb[0].mxu0 %v90
  %v171 = vpop.f32.mrb[0].mxu0
  %v172 = vadd.f32 0.0, %v171
  %v173 = vpop.f32.mrb[0].mxu0
  %v174 = vadd.f32 0.0, %v173
  %175 = vdwg.mxu0
  %vm176 = vcmask 523264
  %v178 = vsel %vm176, %v63, 0
  %v181 = vsel %vm176, %v64, 0
  %183 = vmatprep.subr.mxu0 %v66
  %184 = vmatpush1.msra.mxu0 %v65
  %185 = vmatprep.subr.mxu0 %v68
  %186 = vmatpush1.msra.mxu0 %v67
  %187 = vmatprep.subr.mxu0 %v70
  %188 = vmatpush1.msra.mxu0 %v69
  %189 = vmatprep.subr.mxu0 %v72
  %190 = vmatpush1.msra.mxu0 %v71
  %191 = vmatprep.subr.mxu0 %v74
  %192 = vmatpush1.msra.mxu0 %v73
  %193 = vmatprep.subr.mxu0 %v76
  %194 = vmatpush1.msra.mxu0 %v75
  %195 = vmatprep.subr.mxu0 %v78
  %196 = vmatpush1.msra.mxu0 %v77
  %197 = vmatprep.subr.mxu0 %v80
  %198 = vmatpush1.msra.mxu0 %v79
  %199 = vmatprep.subr.mxu0 0.0
  %200 = vmatpush1.msra.mxu0 0.0
  %201 = vmatprep.subr.mxu0 0.0
  %202 = vmatpush1.msra.mxu0 0.0
  %203 = vmatprep.subr.mxu0 0.0
  %204 = vmatpush1.msra.mxu0 0.0
  %205 = vmatprep.subr.mxu0 0.0
  %206 = vmatpush1.msra.mxu0 0.0
  %207 = vmatprep.subr.mxu0 0.0
  %208 = vmatpush1.msra.mxu0 0.0
  %209 = vmatprep.subr.mxu0 0.0
  %210 = vmatpush1.msra.mxu0 0.0
  %211 = vmatprep.subr.mxu0 0.0
  %212 = vmatpush1.msra.mxu0 0.0
  %213 = vmatprep.subr.mxu0 0.0
  %214 = vmatpush1.msra.mxu0 0.0
  %215 = vmatprep.subr.mxu0 0.0
  %216 = vmatpush1.msra.mxu0 0.0
  %217 = vmatprep.subr.mxu0 0.0
  %218 = vmatpush1.msra.mxu0 0.0
  %219 = vmatprep.subr.mxu0 0.0
  %220 = vmatpush1.msra.mxu0 0.0
  %221 = vmatprep.subr.mxu0 0.0
  %222 = vmatpush1.msra.mxu0 0.0
  %223 = vmatprep.subr.mxu0 0.0
  %224 = vmatpush1.msra.mxu0 0.0
  %225 = vmatprep.subr.mxu0 0.0
  %226 = vmatpush1.msra.mxu0 0.0
  %227 = vmatprep.subr.mxu0 0.0
  %228 = vmatpush1.msra.mxu0 0.0
  %229 = vmatprep.subr.mxu0 0.0
  %230 = vmatpush1.msra.mxu0 0.0
  %231 = vmatprep.subr.mxu0 0.0
  %232 = vmatpush1.msra.mxu0 0.0
  %233 = vmatprep.subr.mxu0 0.0
  %234 = vmatpush1.msra.mxu0 0.0
  %235 = vmatprep.subr.mxu0 0.0
  %236 = vmatpush1.msra.mxu0 0.0
  %237 = vmatprep.subr.mxu0 0.0
  %238 = vmatpush1.msra.mxu0 0.0
  %239 = vmatprep.subr.mxu0 0.0
  %240 = vmatpush1.msra.mxu0 0.0
  %241 = vmatprep.subr.mxu0 0.0
  %242 = vmatpush1.msra.mxu0 0.0
  %243 = vmatprep.subr.mxu0 0.0
  %244 = vmatpush1.msra.mxu0 0.0
  %245 = vmatprep.subr.mxu0 0.0
  %246 = vmatpush1.msra.mxu0 0.0
  %247 = vmatprep.mubr.f32.mxu0 0.0
  %248 = vmatmul.mubr.f32.gmra.mrb[0].mxu0 %v178
  %v249 = vpop.f32.mrb[0].mxu0
  %v250 = vadd.f32 %v166, %v249
  %v251 = vpop.f32.mrb[0].mxu0
  %v252 = vadd.f32 %v168, %v251
  %253 = vmatprep.mubr.f32.mxu0 0.0
  %254 = vmatmul.mubr.f32.gmra.mrb[0].mxu0 %v181
  %v255 = vpop.f32.mrb[0].mxu0
  %v256 = vadd.f32 %v172, %v255
  %v257 = vpop.f32.mrb[0].mxu0
  %v258 = vadd.f32 %v174, %v257
  %259 = vdwg.mxu0
  %v260 = vld [vmem:[%s5] sm:$0x3]
  %v262 = vlaneseq
  %v263 = vshrl.u32 %v262, 7
  %v264 = vsub.s32 0, %v263
  %v265 = vrot.slane %v260, %v264
  %v266 = vlaneseq
  %v267 = vshrl.u32 %v266, 7
  %v268 = vsub.s32 1, %v267
  %v269 = vrot.slane %v260, %v268
  %v272 = vadd.f32 %v250, %v265
  %v273 = vadd.f32 %v252, %v269
  %v274 = vadd.f32 %v256, %v265
  %v275 = vadd.f32 %v258, %v269
  %v276 = vld [vmem:[%s6] sm:$0xff]
  %v277 = vld [vmem:[%s6 + $0x8] sm:$0xff]
  %v278 = vld [vmem:[%s6 + $0x10] sm:$0xff]
  %v279 = vld [vmem:[%s6 + $0x18] sm:$0xff]
  %v280 = vld [vmem:[%s6 + $0x20] sm:$0xff]
  %v281 = vld [vmem:[%s6 + $0x28] sm:$0xff]
  %v282 = vld [vmem:[%s6 + $0x30] sm:$0xff]
  %v283 = vld [vmem:[%s6 + $0x38] sm:$0xff]
  %v285 = vrot.slane %v275, 4
  %v287 = vsel %vm92, %v272, %v285
  %v289 = vsel %vm176, 0.0, 0
  %291 = vmatprep.subr.mxu0 0.0
  %292 = vmatpush1.msra.mxu0 %v276
  %293 = vmatprep.subr.mxu0 0.0
  %294 = vmatpush1.msra.mxu0 %v277
  %295 = vmatprep.subr.mxu0 0.0
  %296 = vmatpush1.msra.mxu0 %v278
  %297 = vmatprep.subr.mxu0 0.0
  %298 = vmatpush1.msra.mxu0 %v279
  %299 = vmatprep.subr.mxu0 0.0
  %300 = vmatpush1.msra.mxu0 %v280
  %301 = vmatprep.subr.mxu0 0.0
  %302 = vmatpush1.msra.mxu0 %v281
  %303 = vmatprep.subr.mxu0 0.0
  %304 = vmatpush1.msra.mxu0 %v282
  %305 = vmatprep.subr.mxu0 0.0
  %306 = vmatpush1.msra.mxu0 %v283
  %307 = vmatprep.subr.mxu0 0.0
  %308 = vmatpush1.msra.mxu0 0.0
  %309 = vmatprep.subr.mxu0 0.0
  %310 = vmatpush1.msra.mxu0 0.0
  %311 = vmatprep.subr.mxu0 0.0
  %312 = vmatpush1.msra.mxu0 0.0
  %313 = vmatprep.subr.mxu0 0.0
  %314 = vmatpush1.msra.mxu0 0.0
  %315 = vmatprep.subr.mxu0 0.0
  %316 = vmatpush1.msra.mxu0 0.0
  %317 = vmatprep.subr.mxu0 0.0
  %318 = vmatpush1.msra.mxu0 0.0
  %319 = vmatprep.subr.mxu0 0.0
  %320 = vmatpush1.msra.mxu0 0.0
  %321 = vmatprep.subr.mxu0 0.0
  %322 = vmatpush1.msra.mxu0 0.0
  %323 = vmatprep.subr.mxu0 0.0
  %324 = vmatpush1.msra.mxu0 0.0
  %325 = vmatprep.subr.mxu0 0.0
  %326 = vmatpush1.msra.mxu0 0.0
  %327 = vmatprep.subr.mxu0 0.0
  %328 = vmatpush1.msra.mxu0 0.0
  %329 = vmatprep.subr.mxu0 0.0
  %330 = vmatpush1.msra.mxu0 0.0
  %331 = vmatprep.subr.mxu0 0.0
  %332 = vmatpush1.msra.mxu0 0.0
  %333 = vmatprep.subr.mxu0 0.0
  %334 = vmatpush1.msra.mxu0 0.0
  %335 = vmatprep.subr.mxu0 0.0
  %336 = vmatpush1.msra.mxu0 0.0
  %337 = vmatprep.subr.mxu0 0.0
  %338 = vmatpush1.msra.mxu0 0.0
  %339 = vmatprep.subr.mxu0 0.0
  %340 = vmatpush1.msra.mxu0 0.0
  %341 = vmatprep.subr.mxu0 0.0
  %342 = vmatpush1.msra.mxu0 0.0
  %343 = vmatprep.subr.mxu0 0.0
  %344 = vmatpush1.msra.mxu0 0.0
  %345 = vmatprep.subr.mxu0 0.0
  %346 = vmatpush1.msra.mxu0 0.0
  %347 = vmatprep.subr.mxu0 0.0
  %348 = vmatpush1.msra.mxu0 0.0
  %349 = vmatprep.subr.mxu0 0.0
  %350 = vmatpush1.msra.mxu0 0.0
  %351 = vmatprep.subr.mxu0 0.0
  %352 = vmatpush1.msra.mxu0 0.0
  %353 = vmatprep.subr.mxu0 0.0
  %354 = vmatpush1.msra.mxu0 0.0
  %355 = vmatprep.mubr.f32.mxu0 0.0
  %356 = vmatmul.mubr.f32.gmra.mrb[0].mxu0 %v289
  %v357 = vpop.f32.mrb[0].mxu0
  %v358 = vadd.f32 0.0, %v357
  %v359 = vpop.f32.mrb[0].mxu0
  %360 = vdwg.mxu0
  %v361 = vadd.f32 %v287, %v358
  %v362 = vxor.u32 %v361, 2147483648
  %v363 = vmul.f32 %v362, 1.442695
  %v364 = vpow.pop %v363
  %v365 = vadd.f32 %v364, 1.0
  %v366 = vrcp.pop %v365
  %v367 = vmul.f32 1.0, %v366
  %v368 = vtanh.pop %v361
  %v369 = vmul.f32 %v367, 0.0
  %371 = vrot.lane.b32.xlu0 %v368, 64
  %v372 = vpop.permute.xlu0 %371
  %v374 = vmul.f32 %v367, %v372
  %376 = vrot.lane.b32.xlu0 %v374, 32
  %v377 = vpop.permute.xlu0 %376
  %v379 = vadd.f32 %v369, %v377
  %v380 = vtanh.pop %v379
  %382 = vrot.lane.b32.xlu0 %v380, 64
  %v383 = vpop.permute.xlu0 %382
  %v385 = vmul.f32 %v367, %v383
  %387 = vset.pattern.permute.xlu0 0
  %388 = vperm.xlu0 %387, %v48
  %v389 = vpop.permute.xlu0 %388
  %v391 = vmul.f32 %v385, %v389
  %v392 = vmul.f32 %v379, %v389
  %394 = vrot.lane.b32.xlu0 %v391, 32
  %v395 = vpop.permute.xlu0 %394
  %397 = vrot.lane.b32.xlu0 %v391, 64
  %v398 = vpop.permute.xlu0 %397
  %vm400 = vcmask 261120
  %v401 = vsel %vm400, %v395, %v398
  %v402 = vmul.f32 %v401, %v47
  %v404 = vrot.slane %v272, 2
  %v406 = vrot.slane %v275, 2
  %v408 = vsel %vm92, %v404, %v406
  %v410 = vsel %vm176, %v402, 0
  %412 = vmatprep.subr.mxu0 0.0
  %413 = vmatpush1.msra.mxu0 %v276
  %414 = vmatprep.subr.mxu0 0.0
  %415 = vmatpush1.msra.mxu0 %v277
  %416 = vmatprep.subr.mxu0 0.0
  %417 = vmatpush1.msra.mxu0 %v278
  %418 = vmatprep.subr.mxu0 0.0
  %419 = vmatpush1.msra.mxu0 %v279
  %420 = vmatprep.subr.mxu0 0.0
  %421 = vmatpush1.msra.mxu0 %v280
  %422 = vmatprep.subr.mxu0 0.0
  %423 = vmatpush1.msra.mxu0 %v281
  %424 = vmatprep.subr.mxu0 0.0
  %425 = vmatpush1.msra.mxu0 %v282
  %426 = vmatprep.subr.mxu0 0.0
  %427 = vmatpush1.msra.mxu0 %v283
  %428 = vmatprep.subr.mxu0 0.0
  %429 = vmatpush1.msra.mxu0 0.0
  %430 = vmatprep.subr.mxu0 0.0
  %431 = vmatpush1.msra.mxu0 0.0
  %432 = vmatprep.subr.mxu0 0.0
  %433 = vmatpush1.msra.mxu0 0.0
  %434 = vmatprep.subr.mxu0 0.0
  %435 = vmatpush1.msra.mxu0 0.0
  %436 = vmatprep.subr.mxu0 0.0
  %437 = vmatpush1.msra.mxu0 0.0
  %438 = vmatprep.subr.mxu0 0.0
  %439 = vmatpush1.msra.mxu0 0.0
  %440 = vmatprep.subr.mxu0 0.0
  %441 = vmatpush1.msra.mxu0 0.0
  %442 = vmatprep.subr.mxu0 0.0
  %443 = vmatpush1.msra.mxu0 0.0
  %444 = vmatprep.subr.mxu0 0.0
  %445 = vmatpush1.msra.mxu0 0.0
  %446 = vmatprep.subr.mxu0 0.0
  %447 = vmatpush1.msra.mxu0 0.0
  %448 = vmatprep.subr.mxu0 0.0
  %449 = vmatpush1.msra.mxu0 0.0
  %450 = vmatprep.subr.mxu0 0.0
  %451 = vmatpush1.msra.mxu0 0.0
  %452 = vmatprep.subr.mxu0 0.0
  %453 = vmatpush1.msra.mxu0 0.0
  %454 = vmatprep.subr.mxu0 0.0
  %455 = vmatpush1.msra.mxu0 0.0
  %456 = vmatprep.subr.mxu0 0.0
  %457 = vmatpush1.msra.mxu0 0.0
  %458 = vmatprep.subr.mxu0 0.0
  %459 = vmatpush1.msra.mxu0 0.0
  %460 = vmatprep.subr.mxu0 0.0
  %461 = vmatpush1.msra.mxu0 0.0
  %462 = vmatprep.subr.mxu0 0.0
  %463 = vmatpush1.msra.mxu0 0.0
  %464 = vmatprep.subr.mxu0 0.0
  %465 = vmatpush1.msra.mxu0 0.0
  %466 = vmatprep.subr.mxu0 0.0
  %467 = vmatpush1.msra.mxu0 0.0
  %468 = vmatprep.subr.mxu0 0.0
  %469 = vmatpush1.msra.mxu0 0.0
  %470 = vmatprep.subr.mxu0 0.0
  %471 = vmatpush1.msra.mxu0 0.0
  %472 = vmatprep.subr.mxu0 0.0
  %473 = vmatpush1.msra.mxu0 0.0
  %474 = vmatprep.subr.mxu0 0.0
  %475 = vmatpush1.msra.mxu0 0.0
  %476 = vmatprep.mubr.f32.mxu0 0.0
  %477 = vmatmul.mubr.f32.gmra.mrb[0].mxu0 %v410
  %v478 = vpop.f32.mrb[0].mxu0
  %v479 = vadd.f32 0.0, %v478
  %v480 = vpop.f32.mrb[0].mxu0
  %481 = vdwg.mxu0
  %v482 = vadd.f32 %v408, %v479
  %v483 = vxor.u32 %v482, 2147483648
  %v484 = vmul.f32 %v483, 1.442695
  %v485 = vpow.pop %v484
  %v486 = vadd.f32 %v485, 1.0
  %v487 = vrcp.pop %v486
  %v488 = vmul.f32 1.0, %v487
  %v489 = vtanh.pop %v482
  %v490 = vmul.f32 %v488, %v392
  %492 = vrot.lane.b32.xlu0 %v489, 64
  %v493 = vpop.permute.xlu0 %492
  %v495 = vmul.f32 %v488, %v493
  %497 = vrot.lane.b32.xlu0 %v495, 32
  %v498 = vpop.permute.xlu0 %497
  %v500 = vadd.f32 %v490, %v498
  %v501 = vtanh.pop %v500
  %503 = vrot.lane.b32.xlu0 %v501, 64
  %v504 = vpop.permute.xlu0 %503
  %v506 = vmul.f32 %v488, %v504
  %507 = vset.pattern.permute.xlu0 1
  %508 = vperm.xlu0 %507, %v48
  %v509 = vpop.permute.xlu0 %508
  %v511 = vmul.f32 %v506, %v509
  %v512 = vmul.f32 %v500, %v509
  %514 = vrot.lane.b32.xlu0 %v511, 32
  %v515 = vpop.permute.xlu0 %514
  %517 = vrot.lane.b32.xlu0 %v511, 64
  %v518 = vpop.permute.xlu0 %517
  %v520 = vsel %vm400, %v515, %v518
  %v521 = vmul.f32 %v520, %v47
  %v522 = vrot.slane %v272, 4
  %v524 = vsel %vm92, %v522, %v275
  %v526 = vsel %vm176, %v521, 0
  %528 = vmatprep.subr.mxu0 0.0
  %529 = vmatpush1.msra.mxu0 %v276
  %530 = vmatprep.subr.mxu0 0.0
  %531 = vmatpush1.msra.mxu0 %v277
  %532 = vmatprep.subr.mxu0 0.0
  %533 = vmatpush1.msra.mxu0 %v278
  %534 = vmatprep.subr.mxu0 0.0
  %535 = vmatpush1.msra.mxu0 %v279
  %536 = vmatprep.subr.mxu0 0.0
  %537 = vmatpush1.msra.mxu0 %v280
  %538 = vmatprep.subr.mxu0 0.0
  %539 = vmatpush1.msra.mxu0 %v281
  %540 = vmatprep.subr.mxu0 0.0
  %541 = vmatpush1.msra.mxu0 %v282
  %542 = vmatprep.subr.mxu0 0.0
  %543 = vmatpush1.msra.mxu0 %v283
  %544 = vmatprep.subr.mxu0 0.0
  %545 = vmatpush1.msra.mxu0 0.0
  %546 = vmatprep.subr.mxu0 0.0
  %547 = vmatpush1.msra.mxu0 0.0
  %548 = vmatprep.subr.mxu0 0.0
  %549 = vmatpush1.msra.mxu0 0.0
  %550 = vmatprep.subr.mxu0 0.0
  %551 = vmatpush1.msra.mxu0 0.0
  %552 = vmatprep.subr.mxu0 0.0
  %553 = vmatpush1.msra.mxu0 0.0
  %554 = vmatprep.subr.mxu0 0.0
  %555 = vmatpush1.msra.mxu0 0.0
  %556 = vmatprep.subr.mxu0 0.0
  %557 = vmatpush1.msra.mxu0 0.0
  %558 = vmatprep.subr.mxu0 0.0
  %559 = vmatpush1.msra.mxu0 0.0
  %560 = vmatprep.subr.mxu0 0.0
  %561 = vmatpush1.msra.mxu0 0.0
  %562 = vmatprep.subr.mxu0 0.0
  %563 = vmatpush1.msra.mxu0 0.0
  %564 = vmatprep.subr.mxu0 0.0
  %565 = vmatpush1.msra.mxu0 0.0
  %566 = vmatprep.subr.mxu0 0.0
  %567 = vmatpush1.msra.mxu0 0.0
  %568 = vmatprep.subr.mxu0 0.0
  %569 = vmatpush1.msra.mxu0 0.0
  %570 = vmatprep.subr.mxu0 0.0
  %571 = vmatpush1.msra.mxu0 0.0
  %572 = vmatprep.subr.mxu0 0.0
  %573 = vmatpush1.msra.mxu0 0.0
  %574 = vmatprep.subr.mxu0 0.0
  %575 = vmatpush1.msra.mxu0 0.0
  %576 = vmatprep.subr.mxu0 0.0
  %577 = vmatpush1.msra.mxu0 0.0
  %578 = vmatprep.subr.mxu0 0.0
  %579 = vmatpush1.msra.mxu0 0.0
  %580 = vmatprep.subr.mxu0 0.0
  %581 = vmatpush1.msra.mxu0 0.0
  %582 = vmatprep.subr.mxu0 0.0
  %583 = vmatpush1.msra.mxu0 0.0
  %584 = vmatprep.subr.mxu0 0.0
  %585 = vmatpush1.msra.mxu0 0.0
  %586 = vmatprep.subr.mxu0 0.0
  %587 = vmatpush1.msra.mxu0 0.0
  %588 = vmatprep.subr.mxu0 0.0
  %589 = vmatpush1.msra.mxu0 0.0
  %590 = vmatprep.subr.mxu0 0.0
  %591 = vmatpush1.msra.mxu0 0.0
  %592 = vmatprep.mubr.f32.mxu0 0.0
  %593 = vmatmul.mubr.f32.gmra.mrb[0].mxu0 %v526
  %v594 = vpop.f32.mrb[0].mxu0
  %v595 = vadd.f32 0.0, %v594
  %v596 = vpop.f32.mrb[0].mxu0
  %597 = vdwg.mxu0
  %v598 = vadd.f32 %v524, %v595
  %v599 = vxor.u32 %v598, 2147483648
  %v600 = vmul.f32 %v599, 1.442695
  %v601 = vpow.pop %v600
  %v602 = vadd.f32 %v601, 1.0
  %v603 = vrcp.pop %v602
  %v604 = vmul.f32 1.0, %v603
  %v605 = vtanh.pop %v598
  %v606 = vmul.f32 %v604, %v512
  %608 = vrot.lane.b32.xlu0 %v605, 64
  %v609 = vpop.permute.xlu0 %608
  %v611 = vmul.f32 %v604, %v609
  %613 = vrot.lane.b32.xlu0 %v611, 32
  %v614 = vpop.permute.xlu0 %613
  %v616 = vadd.f32 %v606, %v614
  %v617 = vtanh.pop %v616
  %619 = vrot.lane.b32.xlu0 %v617, 64
  %v620 = vpop.permute.xlu0 %619
  %v622 = vmul.f32 %v604, %v620
  %623 = vset.pattern.permute.xlu0 2
  %624 = vperm.xlu0 %623, %v48
  %v625 = vpop.permute.xlu0 %624
  %v627 = vmul.f32 %v622, %v625
  %v628 = vmul.f32 %v616, %v625
  %630 = vrot.lane.b32.xlu0 %v627, 32
  %v631 = vpop.permute.xlu0 %630
  %633 = vrot.lane.b32.xlu0 %v627, 64
  %v634 = vpop.permute.xlu0 %633
  %v636 = vsel %vm400, %v631, %v634
  %v637 = vmul.f32 %v636, %v47
  %v638 = vrot.slane %v272, 6
  %v640 = vrot.slane %v275, 6
  %v642 = vsel %vm92, %v638, %v640
  %v644 = vsel %vm176, %v637, 0
  %646 = vmatprep.subr.mxu0 0.0
  %647 = vmatpush1.msra.mxu0 %v276
  %648 = vmatprep.subr.mxu0 0.0
  %649 = vmatpush1.msra.mxu0 %v277
  %650 = vmatprep.subr.mxu0 0.0
  %651 = vmatpush1.msra.mxu0 %v278
  %652 = vmatprep.subr.mxu0 0.0
  %653 = vmatpush1.msra.mxu0 %v279
  %654 = vmatprep.subr.mxu0 0.0
  %655 = vmatpush1.msra.mxu0 %v280
  %656 = vmatprep.subr.mxu0 0.0
  %657 = vmatpush1.msra.mxu0 %v281
  %658 = vmatprep.subr.mxu0 0.0
  %659 = vmatpush1.msra.mxu0 %v282
  %660 = vmatprep.subr.mxu0 0.0
  %661 = vmatpush1.msra.mxu0 %v283
  %662 = vmatprep.subr.mxu0 0.0
  %663 = vmatpush1.msra.mxu0 0.0
  %664 = vmatprep.subr.mxu0 0.0
  %665 = vmatpush1.msra.mxu0 0.0
  %666 = vmatprep.subr.mxu0 0.0
  %667 = vmatpush1.msra.mxu0 0.0
  %668 = vmatprep.subr.mxu0 0.0
  %669 = vmatpush1.msra.mxu0 0.0
  %670 = vmatprep.subr.mxu0 0.0
  %671 = vmatpush1.msra.mxu0 0.0
  %672 = vmatprep.subr.mxu0 0.0
  %673 = vmatpush1.msra.mxu0 0.0
  %674 = vmatprep.subr.mxu0 0.0
  %675 = vmatpush1.msra.mxu0 0.0
  %676 = vmatprep.subr.mxu0 0.0
  %677 = vmatpush1.msra.mxu0 0.0
  %678 = vmatprep.subr.mxu0 0.0
  %679 = vmatpush1.msra.mxu0 0.0
  %680 = vmatprep.subr.mxu0 0.0
  %681 = vmatpush1.msra.mxu0 0.0
  %682 = vmatprep.subr.mxu0 0.0
  %683 = vmatpush1.msra.mxu0 0.0
  %684 = vmatprep.subr.mxu0 0.0
  %685 = vmatpush1.msra.mxu0 0.0
  %686 = vmatprep.subr.mxu0 0.0
  %687 = vmatpush1.msra.mxu0 0.0
  %688 = vmatprep.subr.mxu0 0.0
  %689 = vmatpush1.msra.mxu0 0.0
  %690 = vmatprep.subr.mxu0 0.0
  %691 = vmatpush1.msra.mxu0 0.0
  %692 = vmatprep.subr.mxu0 0.0
  %693 = vmatpush1.msra.mxu0 0.0
  %694 = vmatprep.subr.mxu0 0.0
  %695 = vmatpush1.msra.mxu0 0.0
  %696 = vmatprep.subr.mxu0 0.0
  %697 = vmatpush1.msra.mxu0 0.0
  %698 = vmatprep.subr.mxu0 0.0
  %699 = vmatpush1.msra.mxu0 0.0
  %700 = vmatprep.subr.mxu0 0.0
  %701 = vmatpush1.msra.mxu0 0.0
  %702 = vmatprep.subr.mxu0 0.0
  %703 = vmatpush1.msra.mxu0 0.0
  %704 = vmatprep.subr.mxu0 0.0
  %705 = vmatpush1.msra.mxu0 0.0
  %706 = vmatprep.subr.mxu0 0.0
  %707 = vmatpush1.msra.mxu0 0.0
  %708 = vmatprep.subr.mxu0 0.0
  %709 = vmatpush1.msra.mxu0 0.0
  %710 = vmatprep.mubr.f32.mxu0 0.0
  %711 = vmatmul.mubr.f32.gmra.mrb[0].mxu0 %v644
  %v712 = vpop.f32.mrb[0].mxu0
  %v713 = vadd.f32 0.0, %v712
  %v714 = vpop.f32.mrb[0].mxu0
  %715 = vdwg.mxu0
  %v716 = vadd.f32 %v642, %v713
  %v717 = vxor.u32 %v716, 2147483648
  %v718 = vmul.f32 %v717, 1.442695
  %v719 = vpow.pop %v718
  %v720 = vadd.f32 %v719, 1.0
  %v721 = vrcp.pop %v720
  %v722 = vmul.f32 1.0, %v721
  %v723 = vtanh.pop %v716
  %v724 = vmul.f32 %v722, %v628
  %726 = vrot.lane.b32.xlu0 %v723, 64
  %v727 = vpop.permute.xlu0 %726
  %v729 = vmul.f32 %v722, %v727
  %731 = vrot.lane.b32.xlu0 %v729, 32
  %v732 = vpop.permute.xlu0 %731
  %v734 = vadd.f32 %v724, %v732
  %v735 = vtanh.pop %v734
  %737 = vrot.lane.b32.xlu0 %v735, 64
  %v738 = vpop.permute.xlu0 %737
  %v740 = vmul.f32 %v722, %v738
  %741 = vset.pattern.permute.xlu0 3
  %742 = vperm.xlu0 %741, %v48
  %v743 = vpop.permute.xlu0 %742
  %v745 = vmul.f32 %v740, %v743
  %v746 = vmul.f32 %v734, %v743
  %748 = vrot.lane.b32.xlu0 %v745, 32
  %v749 = vpop.permute.xlu0 %748
  %751 = vrot.lane.b32.xlu0 %v745, 64
  %v752 = vpop.permute.xlu0 %751
  %v754 = vsel %vm400, %v749, %v752
  %v755 = vmul.f32 %v754, %v47
  %v757 = vrot.slane %v273, 4
  %v759 = vsel %vm92, %v274, %v757
  %v761 = vsel %vm176, %v755, 0
  %763 = vmatprep.subr.mxu0 0.0
  %764 = vmatpush1.msra.mxu0 %v276
  %765 = vmatprep.subr.mxu0 0.0
  %766 = vmatpush1.msra.mxu0 %v277
  %767 = vmatprep.subr.mxu0 0.0
  %768 = vmatpush1.msra.mxu0 %v278
  %769 = vmatprep.subr.mxu0 0.0
  %770 = vmatpush1.msra.mxu0 %v279
  %771 = vmatprep.subr.mxu0 0.0
  %772 = vmatpush1.msra.mxu0 %v280
  %773 = vmatprep.subr.mxu0 0.0
  %774 = vmatpush1.msra.mxu0 %v281
  %775 = vmatprep.subr.mxu0 0.0
  %776 = vmatpush1.msra.mxu0 %v282
  %777 = vmatprep.subr.mxu0 0.0
  %778 = vmatpush1.msra.mxu0 %v283
  %779 = vmatprep.subr.mxu0 0.0
  %780 = vmatpush1.msra.mxu0 0.0
  %781 = vmatprep.subr.mxu0 0.0
  %782 = vmatpush1.msra.mxu0 0.0
  %783 = vmatprep.subr.mxu0 0.0
  %784 = vmatpush1.msra.mxu0 0.0
  %785 = vmatprep.subr.mxu0 0.0
  %786 = vmatpush1.msra.mxu0 0.0
  %787 = vmatprep.subr.mxu0 0.0
  %788 = vmatpush1.msra.mxu0 0.0
  %789 = vmatprep.subr.mxu0 0.0
  %790 = vmatpush1.msra.mxu0 0.0
  %791 = vmatprep.subr.mxu0 0.0
  %792 = vmatpush1.msra.mxu0 0.0
  %793 = vmatprep.subr.mxu0 0.0
  %794 = vmatpush1.msra.mxu0 0.0
  %795 = vmatprep.subr.mxu0 0.0
  %796 = vmatpush1.msra.mxu0 0.0
  %797 = vmatprep.subr.mxu0 0.0
  %798 = vmatpush1.msra.mxu0 0.0
  %799 = vmatprep.subr.mxu0 0.0
  %800 = vmatpush1.msra.mxu0 0.0
  %801 = vmatprep.subr.mxu0 0.0
  %802 = vmatpush1.msra.mxu0 0.0
  %803 = vmatprep.subr.mxu0 0.0
  %804 = vmatpush1.msra.mxu0 0.0
  %805 = vmatprep.subr.mxu0 0.0
  %806 = vmatpush1.msra.mxu0 0.0
  %807 = vmatprep.subr.mxu0 0.0
  %808 = vmatpush1.msra.mxu0 0.0
  %809 = vmatprep.subr.mxu0 0.0
  %810 = vmatpush1.msra.mxu0 0.0
  %811 = vmatprep.subr.mxu0 0.0
  %812 = vmatpush1.msra.mxu0 0.0
  %813 = vmatprep.subr.mxu0 0.0
  %814 = vmatpush1.msra.mxu0 0.0
  %815 = vmatprep.subr.mxu0 0.0
  %816 = vmatpush1.msra.mxu0 0.0
  %817 = vmatprep.subr.mxu0 0.0
  %818 = vmatpush1.msra.mxu0 0.0
  %819 = vmatprep.subr.mxu0 0.0
  %820 = vmatpush1.msra.mxu0 0.0
  %821 = vmatprep.subr.mxu0 0.0
  %822 = vmatpush1.msra.mxu0 0.0
  %823 = vmatprep.subr.mxu0 0.0
  %824 = vmatpush1.msra.mxu0 0.0
  %825 = vmatprep.subr.mxu0 0.0
  %826 = vmatpush1.msra.mxu0 0.0
  %827 = vmatprep.mubr.f32.mxu0 0.0
  %828 = vmatmul.mubr.f32.gmra.mrb[0].mxu0 %v761
  %v829 = vpop.f32.mrb[0].mxu0
  %v830 = vadd.f32 0.0, %v829
  %v831 = vpop.f32.mrb[0].mxu0
  %832 = vdwg.mxu0
  %v833 = vadd.f32 %v759, %v830
  %v834 = vxor.u32 %v833, 2147483648
  %v835 = vmul.f32 %v834, 1.442695
  %v836 = vpow.pop %v835
  %v837 = vadd.f32 %v836, 1.0
  %v838 = vrcp.pop %v837
  %v839 = vmul.f32 1.0, %v838
  %v840 = vtanh.pop %v833
  %v841 = vmul.f32 %v839, %v746
  %843 = vrot.lane.b32.xlu0 %v840, 64
  %v844 = vpop.permute.xlu0 %843
  %v846 = vmul.f32 %v839, %v844
  %848 = vrot.lane.b32.xlu0 %v846, 32
  %v849 = vpop.permute.xlu0 %848
  %v851 = vadd.f32 %v841, %v849
  %v852 = vtanh.pop %v851
  %854 = vrot.lane.b32.xlu0 %v852, 64
  %v855 = vpop.permute.xlu0 %854
  %v857 = vmul.f32 %v839, %v855
  %858 = vset.pattern.permute.xlu0 4
  %859 = vperm.xlu0 %858, %v48
  %v860 = vpop.permute.xlu0 %859
  %v862 = vmul.f32 %v857, %v860
  %v863 = vmul.f32 %v851, %v860
  %865 = vrot.lane.b32.xlu0 %v862, 32
  %v866 = vpop.permute.xlu0 %865
  %868 = vrot.lane.b32.xlu0 %v862, 64
  %v869 = vpop.permute.xlu0 %868
  %v871 = vsel %vm400, %v866, %v869
  %v872 = vmul.f32 %v871, %v47
  %v874 = vrot.slane %v274, 2
  %v876 = vrot.slane %v273, 2
  %v878 = vsel %vm92, %v874, %v876
  %v880 = vsel %vm176, %v872, 0
  %882 = vmatprep.subr.mxu0 0.0
  %883 = vmatpush1.msra.mxu0 %v276
  %884 = vmatprep.subr.mxu0 0.0
  %885 = vmatpush1.msra.mxu0 %v277
  %886 = vmatprep.subr.mxu0 0.0
  %887 = vmatpush1.msra.mxu0 %v278
  %888 = vmatprep.subr.mxu0 0.0
  %889 = vmatpush1.msra.mxu0 %v279
  %890 = vmatprep.subr.mxu0 0.0
  %891 = vmatpush1.msra.mxu0 %v280
  %892 = vmatprep.subr.mxu0 0.0
  %893 = vmatpush1.msra.mxu0 %v281
  %894 = vmatprep.subr.mxu0 0.0
  %895 = vmatpush1.msra.mxu0 %v282
  %896 = vmatprep.subr.mxu0 0.0
  %897 = vmatpush1.msra.mxu0 %v283
  %898 = vmatprep.subr.mxu0 0.0
  %899 = vmatpush1.msra.mxu0 0.0
  %900 = vmatprep.subr.mxu0 0.0
  %901 = vmatpush1.msra.mxu0 0.0
  %902 = vmatprep.subr.mxu0 0.0
  %903 = vmatpush1.msra.mxu0 0.0
  %904 = vmatprep.subr.mxu0 0.0
  %905 = vmatpush1.msra.mxu0 0.0
  %906 = vmatprep.subr.mxu0 0.0
  %907 = vmatpush1.msra.mxu0 0.0
  %908 = vmatprep.subr.mxu0 0.0
  %909 = vmatpush1.msra.mxu0 0.0
  %910 = vmatprep.subr.mxu0 0.0
  %911 = vmatpush1.msra.mxu0 0.0
  %912 = vmatprep.subr.mxu0 0.0
  %913 = vmatpush1.msra.mxu0 0.0
  %914 = vmatprep.subr.mxu0 0.0
  %915 = vmatpush1.msra.mxu0 0.0
  %916 = vmatprep.subr.mxu0 0.0
  %917 = vmatpush1.msra.mxu0 0.0
  %918 = vmatprep.subr.mxu0 0.0
  %919 = vmatpush1.msra.mxu0 0.0
  %920 = vmatprep.subr.mxu0 0.0
  %921 = vmatpush1.msra.mxu0 0.0
  %922 = vmatprep.subr.mxu0 0.0
  %923 = vmatpush1.msra.mxu0 0.0
  %924 = vmatprep.subr.mxu0 0.0
  %925 = vmatpush1.msra.mxu0 0.0
  %926 = vmatprep.subr.mxu0 0.0
  %927 = vmatpush1.msra.mxu0 0.0
  %928 = vmatprep.subr.mxu0 0.0
  %929 = vmatpush1.msra.mxu0 0.0
  %930 = vmatprep.subr.mxu0 0.0
  %931 = vmatpush1.msra.mxu0 0.0
  %932 = vmatprep.subr.mxu0 0.0
  %933 = vmatpush1.msra.mxu0 0.0
  %934 = vmatprep.subr.mxu0 0.0
  %935 = vmatpush1.msra.mxu0 0.0
  %936 = vmatprep.subr.mxu0 0.0
  %937 = vmatpush1.msra.mxu0 0.0
  %938 = vmatprep.subr.mxu0 0.0
  %939 = vmatpush1.msra.mxu0 0.0
  %940 = vmatprep.subr.mxu0 0.0
  %941 = vmatpush1.msra.mxu0 0.0
  %942 = vmatprep.subr.mxu0 0.0
  %943 = vmatpush1.msra.mxu0 0.0
  %944 = vmatprep.subr.mxu0 0.0
  %945 = vmatpush1.msra.mxu0 0.0
  %946 = vmatprep.mubr.f32.mxu0 0.0
  %947 = vmatmul.mubr.f32.gmra.mrb[0].mxu0 %v880
  %v948 = vpop.f32.mrb[0].mxu0
  %v949 = vadd.f32 0.0, %v948
  %v950 = vpop.f32.mrb[0].mxu0
  %951 = vdwg.mxu0
  %v952 = vadd.f32 %v878, %v949
  %v953 = vxor.u32 %v952, 2147483648
  %v954 = vmul.f32 %v953, 1.442695
  %v955 = vpow.pop %v954
  %v956 = vadd.f32 %v955, 1.0
  %v957 = vrcp.pop %v956
  %v958 = vmul.f32 1.0, %v957
  %v959 = vtanh.pop %v952
  %v960 = vmul.f32 %v958, %v863
  %962 = vrot.lane.b32.xlu0 %v959, 64
  %v963 = vpop.permute.xlu0 %962
  %v965 = vmul.f32 %v958, %v963
  %967 = vrot.lane.b32.xlu0 %v965, 32
  %v968 = vpop.permute.xlu0 %967
  %v970 = vadd.f32 %v960, %v968
  %v971 = vtanh.pop %v970
  %973 = vrot.lane.b32.xlu0 %v971, 64
  %v974 = vpop.permute.xlu0 %973
  %v976 = vmul.f32 %v958, %v974
  %977 = vset.pattern.permute.xlu0 5
  %978 = vperm.xlu0 %977, %v48
  %v979 = vpop.permute.xlu0 %978
  %v981 = vmul.f32 %v976, %v979
  %v982 = vmul.f32 %v970, %v979
  %984 = vrot.lane.b32.xlu0 %v981, 32
  %v985 = vpop.permute.xlu0 %984
  %987 = vrot.lane.b32.xlu0 %v981, 64
  %v988 = vpop.permute.xlu0 %987
  %v990 = vsel %vm400, %v985, %v988
  %v991 = vmul.f32 %v990, %v47
  %v992 = vrot.slane %v274, 4
  %v994 = vsel %vm92, %v992, %v273
  %v996 = vsel %vm176, %v991, 0
  %998 = vmatprep.subr.mxu0 0.0
  %999 = vmatpush1.msra.mxu0 %v276
  %1000 = vmatprep.subr.mxu0 0.0
  %1001 = vmatpush1.msra.mxu0 %v277
  %1002 = vmatprep.subr.mxu0 0.0
  %1003 = vmatpush1.msra.mxu0 %v278
  %1004 = vmatprep.subr.mxu0 0.0
  %1005 = vmatpush1.msra.mxu0 %v279
  %1006 = vmatprep.subr.mxu0 0.0
  %1007 = vmatpush1.msra.mxu0 %v280
  %1008 = vmatprep.subr.mxu0 0.0
  %1009 = vmatpush1.msra.mxu0 %v281
  %1010 = vmatprep.subr.mxu0 0.0
  %1011 = vmatpush1.msra.mxu0 %v282
  %1012 = vmatprep.subr.mxu0 0.0
  %1013 = vmatpush1.msra.mxu0 %v283
  %1014 = vmatprep.subr.mxu0 0.0
  %1015 = vmatpush1.msra.mxu0 0.0
  %1016 = vmatprep.subr.mxu0 0.0
  %1017 = vmatpush1.msra.mxu0 0.0
  %1018 = vmatprep.subr.mxu0 0.0
  %1019 = vmatpush1.msra.mxu0 0.0
  %1020 = vmatprep.subr.mxu0 0.0
  %1021 = vmatpush1.msra.mxu0 0.0
  %1022 = vmatprep.subr.mxu0 0.0
  %1023 = vmatpush1.msra.mxu0 0.0
  %1024 = vmatprep.subr.mxu0 0.0
  %1025 = vmatpush1.msra.mxu0 0.0
  %1026 = vmatprep.subr.mxu0 0.0
  %1027 = vmatpush1.msra.mxu0 0.0
  %1028 = vmatprep.subr.mxu0 0.0
  %1029 = vmatpush1.msra.mxu0 0.0
  %1030 = vmatprep.subr.mxu0 0.0
  %1031 = vmatpush1.msra.mxu0 0.0
  %1032 = vmatprep.subr.mxu0 0.0
  %1033 = vmatpush1.msra.mxu0 0.0
  %1034 = vmatprep.subr.mxu0 0.0
  %1035 = vmatpush1.msra.mxu0 0.0
  %1036 = vmatprep.subr.mxu0 0.0
  %1037 = vmatpush1.msra.mxu0 0.0
  %1038 = vmatprep.subr.mxu0 0.0
  %1039 = vmatpush1.msra.mxu0 0.0
  %1040 = vmatprep.subr.mxu0 0.0
  %1041 = vmatpush1.msra.mxu0 0.0
  %1042 = vmatprep.subr.mxu0 0.0
  %1043 = vmatpush1.msra.mxu0 0.0
  %1044 = vmatprep.subr.mxu0 0.0
  %1045 = vmatpush1.msra.mxu0 0.0
  %1046 = vmatprep.subr.mxu0 0.0
  %1047 = vmatpush1.msra.mxu0 0.0
  %1048 = vmatprep.subr.mxu0 0.0
  %1049 = vmatpush1.msra.mxu0 0.0
  %1050 = vmatprep.subr.mxu0 0.0
  %1051 = vmatpush1.msra.mxu0 0.0
  %1052 = vmatprep.subr.mxu0 0.0
  %1053 = vmatpush1.msra.mxu0 0.0
  %1054 = vmatprep.subr.mxu0 0.0
  %1055 = vmatpush1.msra.mxu0 0.0
  %1056 = vmatprep.subr.mxu0 0.0
  %1057 = vmatpush1.msra.mxu0 0.0
  %1058 = vmatprep.subr.mxu0 0.0
  %1059 = vmatpush1.msra.mxu0 0.0
  %1060 = vmatprep.subr.mxu0 0.0
  %1061 = vmatpush1.msra.mxu0 0.0
  %1062 = vmatprep.mubr.f32.mxu0 0.0
  %1063 = vmatmul.mubr.f32.gmra.mrb[0].mxu0 %v996
  %v1064 = vpop.f32.mrb[0].mxu0
  %v1065 = vadd.f32 0.0, %v1064
  %v1066 = vpop.f32.mrb[0].mxu0
  %1067 = vdwg.mxu0
  %v1068 = vadd.f32 %v994, %v1065
  %v1069 = vxor.u32 %v1068, 2147483648
  %v1070 = vmul.f32 %v1069, 1.442695
  %v1071 = vpow.pop %v1070
  %v1072 = vadd.f32 %v1071, 1.0
  %v1073 = vrcp.pop %v1072
  %v1074 = vmul.f32 1.0, %v1073
  %v1075 = vtanh.pop %v1068
  %v1076 = vmul.f32 %v1074, %v982
  %1078 = vrot.lane.b32.xlu0 %v1075, 64
  %v1079 = vpop.permute.xlu0 %1078
  %v1081 = vmul.f32 %v1074, %v1079
  %1083 = vrot.lane.b32.xlu0 %v1081, 32
  %v1084 = vpop.permute.xlu0 %1083
  %v1086 = vadd.f32 %v1076, %v1084
  %v1087 = vtanh.pop %v1086
  %1089 = vrot.lane.b32.xlu0 %v1087, 64
  %v1090 = vpop.permute.xlu0 %1089
  %v1092 = vmul.f32 %v1074, %v1090
  %1093 = vset.pattern.permute.xlu0 6
  %1094 = vperm.xlu0 %1093, %v48
  %v1095 = vpop.permute.xlu0 %1094
  %v1097 = vmul.f32 %v1092, %v1095
  %v1098 = vmul.f32 %v1086, %v1095
  %1100 = vrot.lane.b32.xlu0 %v1097, 32
  %v1101 = vpop.permute.xlu0 %1100
  %1103 = vrot.lane.b32.xlu0 %v1097, 64
  %v1104 = vpop.permute.xlu0 %1103
  %v1106 = vsel %vm400, %v1101, %v1104
  %v1107 = vmul.f32 %v1106, %v47
  %v1108 = vrot.slane %v274, 6
  %v1110 = vrot.slane %v273, 6
  %v1112 = vsel %vm92, %v1108, %v1110
  %v1114 = vsel %vm176, %v1107, 0
  %1116 = vmatprep.subr.mxu0 0.0
  %1117 = vmatpush1.msra.mxu0 %v276
  %1118 = vmatprep.subr.mxu0 0.0
  %1119 = vmatpush1.msra.mxu0 %v277
  %1120 = vmatprep.subr.mxu0 0.0
  %1121 = vmatpush1.msra.mxu0 %v278
  %1122 = vmatprep.subr.mxu0 0.0
  %1123 = vmatpush1.msra.mxu0 %v279
  %1124 = vmatprep.subr.mxu0 0.0
  %1125 = vmatpush1.msra.mxu0 %v280
  %1126 = vmatprep.subr.mxu0 0.0
  %1127 = vmatpush1.msra.mxu0 %v281
  %1128 = vmatprep.subr.mxu0 0.0
  %1129 = vmatpush1.msra.mxu0 %v282
  %1130 = vmatprep.subr.mxu0 0.0
  %1131 = vmatpush1.msra.mxu0 %v283
  %1132 = vmatprep.subr.mxu0 0.0
  %1133 = vmatpush1.msra.mxu0 0.0
  %1134 = vmatprep.subr.mxu0 0.0
  %1135 = vmatpush1.msra.mxu0 0.0
  %1136 = vmatprep.subr.mxu0 0.0
  %1137 = vmatpush1.msra.mxu0 0.0
  %1138 = vmatprep.subr.mxu0 0.0
  %1139 = vmatpush1.msra.mxu0 0.0
  %1140 = vmatprep.subr.mxu0 0.0
  %1141 = vmatpush1.msra.mxu0 0.0
  %1142 = vmatprep.subr.mxu0 0.0
  %1143 = vmatpush1.msra.mxu0 0.0
  %1144 = vmatprep.subr.mxu0 0.0
  %1145 = vmatpush1.msra.mxu0 0.0
  %1146 = vmatprep.subr.mxu0 0.0
  %1147 = vmatpush1.msra.mxu0 0.0
  %1148 = vmatprep.subr.mxu0 0.0
  %1149 = vmatpush1.msra.mxu0 0.0
  %1150 = vmatprep.subr.mxu0 0.0
  %1151 = vmatpush1.msra.mxu0 0.0
  %1152 = vmatprep.subr.mxu0 0.0
  %1153 = vmatpush1.msra.mxu0 0.0
  %1154 = vmatprep.subr.mxu0 0.0
  %1155 = vmatpush1.msra.mxu0 0.0
  %1156 = vmatprep.subr.mxu0 0.0
  %1157 = vmatpush1.msra.mxu0 0.0
  %1158 = vmatprep.subr.mxu0 0.0
  %1159 = vmatpush1.msra.mxu0 0.0
  %1160 = vmatprep.subr.mxu0 0.0
  %1161 = vmatpush1.msra.mxu0 0.0
  %1162 = vmatprep.subr.mxu0 0.0
  %1163 = vmatpush1.msra.mxu0 0.0
  %1164 = vmatprep.subr.mxu0 0.0
  %1165 = vmatpush1.msra.mxu0 0.0
  %1166 = vmatprep.subr.mxu0 0.0
  %1167 = vmatpush1.msra.mxu0 0.0
  %1168 = vmatprep.subr.mxu0 0.0
  %1169 = vmatpush1.msra.mxu0 0.0
  %1170 = vmatprep.subr.mxu0 0.0
  %1171 = vmatpush1.msra.mxu0 0.0
  %1172 = vmatprep.subr.mxu0 0.0
  %1173 = vmatpush1.msra.mxu0 0.0
  %1174 = vmatprep.subr.mxu0 0.0
  %1175 = vmatpush1.msra.mxu0 0.0
  %1176 = vmatprep.subr.mxu0 0.0
  %1177 = vmatpush1.msra.mxu0 0.0
  %1178 = vmatprep.subr.mxu0 0.0
  %1179 = vmatpush1.msra.mxu0 0.0
  %1180 = vmatprep.mubr.f32.mxu0 0.0
  %1181 = vmatmul.mubr.f32.gmra.mrb[0].mxu0 %v1114
  %v1182 = vpop.f32.mrb[0].mxu0
  %v1183 = vadd.f32 0.0, %v1182
  %v1184 = vpop.f32.mrb[0].mxu0
  %1185 = vdwg.mxu0
  %v1186 = vadd.f32 %v1112, %v1183
  %v1187 = vxor.u32 %v1186, 2147483648
  %v1188 = vmul.f32 %v1187, 1.442695
  %v1189 = vpow.pop %v1188
  %v1190 = vadd.f32 %v1189, 1.0
  %v1191 = vrcp.pop %v1190
  %v1192 = vmul.f32 1.0, %v1191
  %v1193 = vtanh.pop %v1186
  %v1194 = vmul.f32 %v1192, %v1098
  %1196 = vrot.lane.b32.xlu0 %v1193, 64
  %v1197 = vpop.permute.xlu0 %1196
  %v1199 = vmul.f32 %v1192, %v1197
  %1201 = vrot.lane.b32.xlu0 %v1199, 32
  %v1202 = vpop.permute.xlu0 %1201
  %v1204 = vadd.f32 %v1194, %v1202
  %v1205 = vtanh.pop %v1204
  %1207 = vrot.lane.b32.xlu0 %v1205, 64
  %v1208 = vpop.permute.xlu0 %1207
  %v1210 = vmul.f32 %v1192, %v1208
  %1211 = vset.pattern.permute.xlu0 7
  %1212 = vperm.xlu0 %1211, %v48
  %v1213 = vpop.permute.xlu0 %1212
  %v1215 = vmul.f32 %v1210, %v1213
  %v1216 = vrot.slane %v511, 6
  %v1218 = vrot.slane %v627, 4
  %v1220 = vrot.slane %v745, 2
  %v1222 = vrot.slane %v981, 6
  %v1224 = vrot.slane %v1097, 4
  %v1227 = vrot.slane %v1215, 2
  %v1229 = vsel %vm92, %v391, %v1216
  %vm1230 = vcmask 1043456
  %v1231 = vsel %vm1230, %v1229, %v1218
  %vm1232 = vcmask 1045504
  %v1233 = vsel %vm1232, %v1231, %v1220
  %v1234 = vsel %vm92, %v862, %v1222
  %v1235 = vsel %vm1230, %v1234, %v1224
  %v1236 = vsel %vm1232, %v1235, %v1227
  %v1237 = vrot.slane %v862, 4
  %v1239 = vrot.slane %v391, 4
  %v1241 = vsel %vm92, %v1227, %v1097
  %v1242 = vsel %vm1230, %v1241, %v1222
  %v1243 = vsel %vm1232, %v1242, %v1237
  %v1244 = vsel %vm92, %v1220, %v627
  %v1245 = vsel %vm1230, %v1244, %v1216
  %v1246 = vsel %vm1232, %v1245, %v1239
  %1249 = vrot.lane.b32.xlu0 %v1233, 32
  %v1250 = vpop.permute.xlu0 %1249
  %1251 = vrot.lane.b32.xlu0 %v1236, 32
  %v1252 = vpop.permute.xlu0 %1251
  %1257 = vrot.lane.b32.xlu0 %v1243, 64
  %v1258 = vpop.permute.xlu0 %1257
  %1259 = vrot.lane.b32.xlu0 %v1246, 64
  %v1260 = vpop.permute.xlu0 %1259
  %v1263 = vsel %vm400, %v1250, %v1258
  %v1264 = vsel %vm400, %v1252, %v1260
  %v1265 = vld [vmem:[%s7] sm:$0xff]
  %v1266 = vld [vmem:[%s7 + $0x8] sm:$0xff]
  %v1267 = vld [vmem:[%s7 + $0x10] sm:$0xff]
  %v1268 = vld [vmem:[%s7 + $0x18] sm:$0xff]
  %v1269 = vld [vmem:[%s7 + $0x20] sm:$0xff]
  %v1270 = vld [vmem:[%s7 + $0x28] sm:$0xff]
  %v1271 = vld [vmem:[%s7 + $0x30] sm:$0xff]
  %v1272 = vld [vmem:[%s7 + $0x38] sm:$0xff]
  %v1273 = vld [vmem:[%s7 + $0x40] sm:$0xff]
  %v1274 = vld [vmem:[%s7 + $0x48] sm:$0xff]
  %v1275 = vld [vmem:[%s7 + $0x50] sm:$0xff]
  %v1276 = vld [vmem:[%s7 + $0x58] sm:$0xff]
  %v1277 = vld [vmem:[%s7 + $0x60] sm:$0xff]
  %v1278 = vld [vmem:[%s7 + $0x68] sm:$0xff]
  %v1279 = vld [vmem:[%s7 + $0x70] sm:$0xff]
  %v1280 = vld [vmem:[%s7 + $0x78] sm:$0xff]
  %v1281 = vld [vmem:[%s8] sm:$0x3]
  %v1283 = vlaneseq
  %v1284 = vshrl.u32 %v1283, 7
  %v1285 = vsub.s32 0, %v1284
  %v1286 = vrot.slane %v1281, %v1285
  %v1287 = vlaneseq
  %v1288 = vshrl.u32 %v1287, 7
  %v1289 = vsub.s32 1, %v1288
  %v1290 = vrot.slane %v1281, %v1289
  %v1294 = vsel %vm176, %v1263, 0
  %v1297 = vsel %vm176, %v1264, 0
  %1299 = vmatprep.subr.mxu0 %v1266
  %1300 = vmatpush1.msra.mxu0 %v1265
  %1301 = vmatprep.subr.mxu0 %v1268
  %1302 = vmatpush1.msra.mxu0 %v1267
  %1303 = vmatprep.subr.mxu0 %v1270
  %1304 = vmatpush1.msra.mxu0 %v1269
  %1305 = vmatprep.subr.mxu0 %v1272
  %1306 = vmatpush1.msra.mxu0 %v1271
  %1307 = vmatprep.subr.mxu0 %v1274
  %1308 = vmatpush1.msra.mxu0 %v1273
  %1309 = vmatprep.subr.mxu0 %v1276
  %1310 = vmatpush1.msra.mxu0 %v1275
  %1311 = vmatprep.subr.mxu0 %v1278
  %1312 = vmatpush1.msra.mxu0 %v1277
  %1313 = vmatprep.subr.mxu0 %v1280
  %1314 = vmatpush1.msra.mxu0 %v1279
  %1315 = vmatprep.subr.mxu0 0.0
  %1316 = vmatpush1.msra.mxu0 0.0
  %1317 = vmatprep.subr.mxu0 0.0
  %1318 = vmatpush1.msra.mxu0 0.0
  %1319 = vmatprep.subr.mxu0 0.0
  %1320 = vmatpush1.msra.mxu0 0.0
  %1321 = vmatprep.subr.mxu0 0.0
  %1322 = vmatpush1.msra.mxu0 0.0
  %1323 = vmatprep.subr.mxu0 0.0
  %1324 = vmatpush1.msra.mxu0 0.0
  %1325 = vmatprep.subr.mxu0 0.0
  %1326 = vmatpush1.msra.mxu0 0.0
  %1327 = vmatprep.subr.mxu0 0.0
  %1328 = vmatpush1.msra.mxu0 0.0
  %1329 = vmatprep.subr.mxu0 0.0
  %1330 = vmatpush1.msra.mxu0 0.0
  %1331 = vmatprep.subr.mxu0 0.0
  %1332 = vmatpush1.msra.mxu0 0.0
  %1333 = vmatprep.subr.mxu0 0.0
  %1334 = vmatpush1.msra.mxu0 0.0
  %1335 = vmatprep.subr.mxu0 0.0
  %1336 = vmatpush1.msra.mxu0 0.0
  %1337 = vmatprep.subr.mxu0 0.0
  %1338 = vmatpush1.msra.mxu0 0.0
  %1339 = vmatprep.subr.mxu0 0.0
  %1340 = vmatpush1.msra.mxu0 0.0
  %1341 = vmatprep.subr.mxu0 0.0
  %1342 = vmatpush1.msra.mxu0 0.0
  %1343 = vmatprep.subr.mxu0 0.0
  %1344 = vmatpush1.msra.mxu0 0.0
  %1345 = vmatprep.subr.mxu0 0.0
  %1346 = vmatpush1.msra.mxu0 0.0
  %1347 = vmatprep.subr.mxu0 0.0
  %1348 = vmatpush1.msra.mxu0 0.0
  %1349 = vmatprep.subr.mxu0 0.0
  %1350 = vmatpush1.msra.mxu0 0.0
  %1351 = vmatprep.subr.mxu0 0.0
  %1352 = vmatpush1.msra.mxu0 0.0
  %1353 = vmatprep.subr.mxu0 0.0
  %1354 = vmatpush1.msra.mxu0 0.0
  %1355 = vmatprep.subr.mxu0 0.0
  %1356 = vmatpush1.msra.mxu0 0.0
  %1357 = vmatprep.subr.mxu0 0.0
  %1358 = vmatpush1.msra.mxu0 0.0
  %1359 = vmatprep.subr.mxu0 0.0
  %1360 = vmatpush1.msra.mxu0 0.0
  %1361 = vmatprep.subr.mxu0 0.0
  %1362 = vmatpush1.msra.mxu0 0.0
  %1363 = vmatprep.mubr.f32.mxu0 0.0
  %1364 = vmatmul.mubr.f32.gmra.mrb[0].mxu0 %v1294
  %v1365 = vpop.f32.mrb[0].mxu0
  %v1366 = vadd.f32 %v1286, %v1365
  %v1367 = vpop.f32.mrb[0].mxu0
  %v1368 = vadd.f32 %v1290, %v1367
  %1369 = vmatprep.mubr.f32.mxu0 0.0
  %1370 = vmatmul.mubr.f32.gmra.mrb[0].mxu0 %v1297
  %v1371 = vpop.f32.mrb[0].mxu0
  %v1372 = vadd.f32 %v1286, %v1371
  %v1373 = vpop.f32.mrb[0].mxu0
  %v1374 = vadd.f32 %v1290, %v1373
  %1375 = vdwg.mxu0
  %v1376 = vld [vmem:[%s9] sm:$0xff]
  %v1377 = vld [vmem:[%s9 + $0x8] sm:$0xff]
  %v1378 = vld [vmem:[%s9 + $0x10] sm:$0xff]
  %v1379 = vld [vmem:[%s9 + $0x18] sm:$0xff]
  %v1380 = vld [vmem:[%s9 + $0x20] sm:$0xff]
  %v1381 = vld [vmem:[%s9 + $0x28] sm:$0xff]
  %v1382 = vld [vmem:[%s9 + $0x30] sm:$0xff]
  %v1383 = vld [vmem:[%s9 + $0x38] sm:$0xff]
  %v1385 = vrot.slane %v1374, 4
  %v1387 = vsel %vm92, %v1366, %v1385
  %1388 = vmatprep.subr.mxu0 0.0
  %1389 = vmatpush1.msra.mxu0 %v1376
  %1390 = vmatprep.subr.mxu0 0.0
  %1391 = vmatpush1.msra.mxu0 %v1377
  %1392 = vmatprep.subr.mxu0 0.0
  %1393 = vmatpush1.msra.mxu0 %v1378
  %1394 = vmatprep.subr.mxu0 0.0
  %1395 = vmatpush1.msra.mxu0 %v1379
  %1396 = vmatprep.subr.mxu0 0.0
  %1397 = vmatpush1.msra.mxu0 %v1380
  %1398 = vmatprep.subr.mxu0 0.0
  %1399 = vmatpush1.msra.mxu0 %v1381
  %1400 = vmatprep.subr.mxu0 0.0
  %1401 = vmatpush1.msra.mxu0 %v1382
  %1402 = vmatprep.subr.mxu0 0.0
  %1403 = vmatpush1.msra.mxu0 %v1383
  %1404 = vmatprep.subr.mxu0 0.0
  %1405 = vmatpush1.msra.mxu0 0.0
  %1406 = vmatprep.subr.mxu0 0.0
  %1407 = vmatpush1.msra.mxu0 0.0
  %1408 = vmatprep.subr.mxu0 0.0
  %1409 = vmatpush1.msra.mxu0 0.0
  %1410 = vmatprep.subr.mxu0 0.0
  %1411 = vmatpush1.msra.mxu0 0.0
  %1412 = vmatprep.subr.mxu0 0.0
  %1413 = vmatpush1.msra.mxu0 0.0
  %1414 = vmatprep.subr.mxu0 0.0
  %1415 = vmatpush1.msra.mxu0 0.0
  %1416 = vmatprep.subr.mxu0 0.0
  %1417 = vmatpush1.msra.mxu0 0.0
  %1418 = vmatprep.subr.mxu0 0.0
  %1419 = vmatpush1.msra.mxu0 0.0
  %1420 = vmatprep.subr.mxu0 0.0
  %1421 = vmatpush1.msra.mxu0 0.0
  %1422 = vmatprep.subr.mxu0 0.0
  %1423 = vmatpush1.msra.mxu0 0.0
  %1424 = vmatprep.subr.mxu0 0.0
  %1425 = vmatpush1.msra.mxu0 0.0
  %1426 = vmatprep.subr.mxu0 0.0
  %1427 = vmatpush1.msra.mxu0 0.0
  %1428 = vmatprep.subr.mxu0 0.0
  %1429 = vmatpush1.msra.mxu0 0.0
  %1430 = vmatprep.subr.mxu0 0.0
  %1431 = vmatpush1.msra.mxu0 0.0
  %1432 = vmatprep.subr.mxu0 0.0
  %1433 = vmatpush1.msra.mxu0 0.0
  %1434 = vmatprep.subr.mxu0 0.0
  %1435 = vmatpush1.msra.mxu0 0.0
  %1436 = vmatprep.subr.mxu0 0.0
  %1437 = vmatpush1.msra.mxu0 0.0
  %1438 = vmatprep.subr.mxu0 0.0
  %1439 = vmatpush1.msra.mxu0 0.0
  %1440 = vmatprep.subr.mxu0 0.0
  %1441 = vmatpush1.msra.mxu0 0.0
  %1442 = vmatprep.subr.mxu0 0.0
  %1443 = vmatpush1.msra.mxu0 0.0
  %1444 = vmatprep.subr.mxu0 0.0
  %1445 = vmatpush1.msra.mxu0 0.0
  %1446 = vmatprep.subr.mxu0 0.0
  %1447 = vmatpush1.msra.mxu0 0.0
  %1448 = vmatprep.subr.mxu0 0.0
  %1449 = vmatpush1.msra.mxu0 0.0
  %1450 = vmatprep.subr.mxu0 0.0
  %1451 = vmatpush1.msra.mxu0 0.0
  %1452 = vmatprep.mubr.f32.mxu0 0.0
  %1453 = vmatmul.mubr.f32.gmra.mrb[0].mxu0 %v289
  %v1454 = vpop.f32.mrb[0].mxu0
  %v1455 = vadd.f32 0.0, %v1454
  %v1456 = vpop.f32.mrb[0].mxu0
  %1457 = vdwg.mxu0
  %v1458 = vadd.f32 %v1387, %v1455
  %v1459 = vxor.u32 %v1458, 2147483648
  %v1460 = vmul.f32 %v1459, 1.442695
  %v1461 = vpow.pop %v1460
  %v1462 = vadd.f32 %v1461, 1.0
  %v1463 = vrcp.pop %v1462
  %v1464 = vmul.f32 1.0, %v1463
  %v1465 = vtanh.pop %v1458
  %v1466 = vmul.f32 %v1464, 0.0
  %1468 = vrot.lane.b32.xlu0 %v1465, 64
  %v1469 = vpop.permute.xlu0 %1468
  %v1471 = vmul.f32 %v1464, %v1469
  %1473 = vrot.lane.b32.xlu0 %v1471, 32
  %v1474 = vpop.permute.xlu0 %1473
  %v1476 = vadd.f32 %v1466, %v1474
  %v1477 = vtanh.pop %v1476
  %1479 = vrot.lane.b32.xlu0 %v1477, 64
  %v1480 = vpop.permute.xlu0 %1479
  %v1482 = vmul.f32 %v1464, %v1480
  %v1483 = vmul.f32 %v1482, %v389
  %v1484 = vmul.f32 %v1476, %v389
  %1486 = vrot.lane.b32.xlu0 %v1483, 32
  %v1487 = vpop.permute.xlu0 %1486
  %1489 = vrot.lane.b32.xlu0 %v1483, 64
  %v1490 = vpop.permute.xlu0 %1489
  %v1492 = vsel %vm400, %v1487, %v1490
  %v1493 = vmul.f32 %v1492, %v47
  %v1495 = vrot.slane %v1366, 2
  %v1497 = vrot.slane %v1374, 2
  %v1499 = vsel %vm92, %v1495, %v1497
  %v1501 = vsel %vm176, %v1493, 0
  %1503 = vmatprep.subr.mxu0 0.0
  %1504 = vmatpush1.msra.mxu0 %v1376
  %1505 = vmatprep.subr.mxu0 0.0
  %1506 = vmatpush1.msra.mxu0 %v1377
  %1507 = vmatprep.subr.mxu0 0.0
  %1508 = vmatpush1.msra.mxu0 %v1378
  %1509 = vmatprep.subr.mxu0 0.0
  %1510 = vmatpush1.msra.mxu0 %v1379
  %1511 = vmatprep.subr.mxu0 0.0
  %1512 = vmatpush1.msra.mxu0 %v1380
  %1513 = vmatprep.subr.mxu0 0.0
  %1514 = vmatpush1.msra.mxu0 %v1381
  %1515 = vmatprep.subr.mxu0 0.0
  %1516 = vmatpush1.msra.mxu0 %v1382
  %1517 = vmatprep.subr.mxu0 0.0
  %1518 = vmatpush1.msra.mxu0 %v1383
  %1519 = vmatprep.subr.mxu0 0.0
  %1520 = vmatpush1.msra.mxu0 0.0
  %1521 = vmatprep.subr.mxu0 0.0
  %1522 = vmatpush1.msra.mxu0 0.0
  %1523 = vmatprep.subr.mxu0 0.0
  %1524 = vmatpush1.msra.mxu0 0.0
  %1525 = vmatprep.subr.mxu0 0.0
  %1526 = vmatpush1.msra.mxu0 0.0
  %1527 = vmatprep.subr.mxu0 0.0
  %1528 = vmatpush1.msra.mxu0 0.0
  %1529 = vmatprep.subr.mxu0 0.0
  %1530 = vmatpush1.msra.mxu0 0.0
  %1531 = vmatprep.subr.mxu0 0.0
  %1532 = vmatpush1.msra.mxu0 0.0
  %1533 = vmatprep.subr.mxu0 0.0
  %1534 = vmatpush1.msra.mxu0 0.0
  %1535 = vmatprep.subr.mxu0 0.0
  %1536 = vmatpush1.msra.mxu0 0.0
  %1537 = vmatprep.subr.mxu0 0.0
  %1538 = vmatpush1.msra.mxu0 0.0
  %1539 = vmatprep.subr.mxu0 0.0
  %1540 = vmatpush1.msra.mxu0 0.0
  %1541 = vmatprep.subr.mxu0 0.0
  %1542 = vmatpush1.msra.mxu0 0.0
  %1543 = vmatprep.subr.mxu0 0.0
  %1544 = vmatpush1.msra.mxu0 0.0
  %1545 = vmatprep.subr.mxu0 0.0
  %1546 = vmatpush1.msra.mxu0 0.0
  %1547 = vmatprep.subr.mxu0 0.0
  %1548 = vmatpush1.msra.mxu0 0.0
  %1549 = vmatprep.subr.mxu0 0.0
  %1550 = vmatpush1.msra.mxu0 0.0
  %1551 = vmatprep.subr.mxu0 0.0
  %1552 = vmatpush1.msra.mxu0 0.0
  %1553 = vmatprep.subr.mxu0 0.0
  %1554 = vmatpush1.msra.mxu0 0.0
  %1555 = vmatprep.subr.mxu0 0.0
  %1556 = vmatpush1.msra.mxu0 0.0
  %1557 = vmatprep.subr.mxu0 0.0
  %1558 = vmatpush1.msra.mxu0 0.0
  %1559 = vmatprep.subr.mxu0 0.0
  %1560 = vmatpush1.msra.mxu0 0.0
  %1561 = vmatprep.subr.mxu0 0.0
  %1562 = vmatpush1.msra.mxu0 0.0
  %1563 = vmatprep.subr.mxu0 0.0
  %1564 = vmatpush1.msra.mxu0 0.0
  %1565 = vmatprep.subr.mxu0 0.0
  %1566 = vmatpush1.msra.mxu0 0.0
  %1567 = vmatprep.mubr.f32.mxu0 0.0
  %1568 = vmatmul.mubr.f32.gmra.mrb[0].mxu0 %v1501
  %v1569 = vpop.f32.mrb[0].mxu0
  %v1570 = vadd.f32 0.0, %v1569
  %v1571 = vpop.f32.mrb[0].mxu0
  %1572 = vdwg.mxu0
  %v1573 = vadd.f32 %v1499, %v1570
  %v1574 = vxor.u32 %v1573, 2147483648
  %v1575 = vmul.f32 %v1574, 1.442695
  %v1576 = vpow.pop %v1575
  %v1577 = vadd.f32 %v1576, 1.0
  %v1578 = vrcp.pop %v1577
  %v1579 = vmul.f32 1.0, %v1578
  %v1580 = vtanh.pop %v1573
  %v1581 = vmul.f32 %v1579, %v1484
  %1583 = vrot.lane.b32.xlu0 %v1580, 64
  %v1584 = vpop.permute.xlu0 %1583
  %v1586 = vmul.f32 %v1579, %v1584
  %1588 = vrot.lane.b32.xlu0 %v1586, 32
  %v1589 = vpop.permute.xlu0 %1588
  %v1591 = vadd.f32 %v1581, %v1589
  %v1592 = vtanh.pop %v1591
  %1594 = vrot.lane.b32.xlu0 %v1592, 64
  %v1595 = vpop.permute.xlu0 %1594
  %v1597 = vmul.f32 %v1579, %v1595
  %v1598 = vmul.f32 %v1597, %v509
  %v1599 = vmul.f32 %v1591, %v509
  %1601 = vrot.lane.b32.xlu0 %v1598, 32
  %v1602 = vpop.permute.xlu0 %1601
  %1604 = vrot.lane.b32.xlu0 %v1598, 64
  %v1605 = vpop.permute.xlu0 %1604
  %v1607 = vsel %vm400, %v1602, %v1605
  %v1608 = vmul.f32 %v1607, %v47
  %v1609 = vrot.slane %v1366, 4
  %v1611 = vsel %vm92, %v1609, %v1374
  %v1613 = vsel %vm176, %v1608, 0
  %1615 = vmatprep.subr.mxu0 0.0
  %1616 = vmatpush1.msra.mxu0 %v1376
  %1617 = vmatprep.subr.mxu0 0.0
  %1618 = vmatpush1.msra.mxu0 %v1377
  %1619 = vmatprep.subr.mxu0 0.0
  %1620 = vmatpush1.msra.mxu0 %v1378
  %1621 = vmatprep.subr.mxu0 0.0
  %1622 = vmatpush1.msra.mxu0 %v1379
  %1623 = vmatprep.subr.mxu0 0.0
  %1624 = vmatpush1.msra.mxu0 %v1380
  %1625 = vmatprep.subr.mxu0 0.0
  %1626 = vmatpush1.msra.mxu0 %v1381
  %1627 = vmatprep.subr.mxu0 0.0
  %1628 = vmatpush1.msra.mxu0 %v1382
  %1629 = vmatprep.subr.mxu0 0.0
  %1630 = vmatpush1.msra.mxu0 %v1383
  %1631 = vmatprep.subr.mxu0 0.0
  %1632 = vmatpush1.msra.mxu0 0.0
  %1633 = vmatprep.subr.mxu0 0.0
  %1634 = vmatpush1.msra.mxu0 0.0
  %1635 = vmatprep.subr.mxu0 0.0
  %1636 = vmatpush1.msra.mxu0 0.0
  %1637 = vmatprep.subr.mxu0 0.0
  %1638 = vmatpush1.msra.mxu0 0.0
  %1639 = vmatprep.subr.mxu0 0.0
  %1640 = vmatpush1.msra.mxu0 0.0
  %1641 = vmatprep.subr.mxu0 0.0
  %1642 = vmatpush1.msra.mxu0 0.0
  %1643 = vmatprep.subr.mxu0 0.0
  %1644 = vmatpush1.msra.mxu0 0.0
  %1645 = vmatprep.subr.mxu0 0.0
  %1646 = vmatpush1.msra.mxu0 0.0
  %1647 = vmatprep.subr.mxu0 0.0
  %1648 = vmatpush1.msra.mxu0 0.0
  %1649 = vmatprep.subr.mxu0 0.0
  %1650 = vmatpush1.msra.mxu0 0.0
  %1651 = vmatprep.subr.mxu0 0.0
  %1652 = vmatpush1.msra.mxu0 0.0
  %1653 = vmatprep.subr.mxu0 0.0
  %1654 = vmatpush1.msra.mxu0 0.0
  %1655 = vmatprep.subr.mxu0 0.0
  %1656 = vmatpush1.msra.mxu0 0.0
  %1657 = vmatprep.subr.mxu0 0.0
  %1658 = vmatpush1.msra.mxu0 0.0
  %1659 = vmatprep.subr.mxu0 0.0
  %1660 = vmatpush1.msra.mxu0 0.0
  %1661 = vmatprep.subr.mxu0 0.0
  %1662 = vmatpush1.msra.mxu0 0.0
  %1663 = vmatprep.subr.mxu0 0.0
  %1664 = vmatpush1.msra.mxu0 0.0
  %1665 = vmatprep.subr.mxu0 0.0
  %1666 = vmatpush1.msra.mxu0 0.0
  %1667 = vmatprep.subr.mxu0 0.0
  %1668 = vmatpush1.msra.mxu0 0.0
  %1669 = vmatprep.subr.mxu0 0.0
  %1670 = vmatpush1.msra.mxu0 0.0
  %1671 = vmatprep.subr.mxu0 0.0
  %1672 = vmatpush1.msra.mxu0 0.0
  %1673 = vmatprep.subr.mxu0 0.0
  %1674 = vmatpush1.msra.mxu0 0.0
  %1675 = vmatprep.subr.mxu0 0.0
  %1676 = vmatpush1.msra.mxu0 0.0
  %1677 = vmatprep.subr.mxu0 0.0
  %1678 = vmatpush1.msra.mxu0 0.0
  %1679 = vmatprep.mubr.f32.mxu0 0.0
  %1680 = vmatmul.mubr.f32.gmra.mrb[0].mxu0 %v1613
  %v1681 = vpop.f32.mrb[0].mxu0
  %v1682 = vadd.f32 0.0, %v1681
  %v1683 = vpop.f32.mrb[0].mxu0
  %1684 = vdwg.mxu0
  %v1685 = vadd.f32 %v1611, %v1682
  %v1686 = vxor.u32 %v1685, 2147483648
  %v1687 = vmul.f32 %v1686, 1.442695
  %v1688 = vpow.pop %v1687
  %v1689 = vadd.f32 %v1688, 1.0
  %v1690 = vrcp.pop %v1689
  %v1691 = vmul.f32 1.0, %v1690
  %v1692 = vtanh.pop %v1685
  %v1693 = vmul.f32 %v1691, %v1599
  %1695 = vrot.lane.b32.xlu0 %v1692, 64
  %v1696 = vpop.permute.xlu0 %1695
  %v1698 = vmul.f32 %v1691, %v1696
  %1700 = vrot.lane.b32.xlu0 %v1698, 32
  %v1701 = vpop.permute.xlu0 %1700
  %v1703 = vadd.f32 %v1693, %v1701
  %v1704 = vtanh.pop %v1703
  %1706 = vrot.lane.b32.xlu0 %v1704, 64
  %v1707 = vpop.permute.xlu0 %1706
  %v1709 = vmul.f32 %v1691, %v1707
  %v1710 = vmul.f32 %v1709, %v625
  %v1711 = vmul.f32 %v1703, %v625
  %1713 = vrot.lane.b32.xlu0 %v1710, 32
  %v1714 = vpop.permute.xlu0 %1713
  %1716 = vrot.lane.b32.xlu0 %v1710, 64
  %v1717 = vpop.permute.xlu0 %1716
  %v1719 = vsel %vm400, %v1714, %v1717
  %v1720 = vmul.f32 %v1719, %v47
  %v1721 = vrot.slane %v1366, 6
  %v1723 = vrot.slane %v1374, 6
  %v1725 = vsel %vm92, %v1721, %v1723
  %v1727 = vsel %vm176, %v1720, 0
  %1729 = vmatprep.subr.mxu0 0.0
  %1730 = vmatpush1.msra.mxu0 %v1376
  %1731 = vmatprep.subr.mxu0 0.0
  %1732 = vmatpush1.msra.mxu0 %v1377
  %1733 = vmatprep.subr.mxu0 0.0
  %1734 = vmatpush1.msra.mxu0 %v1378
  %1735 = vmatprep.subr.mxu0 0.0
  %1736 = vmatpush1.msra.mxu0 %v1379
  %1737 = vmatprep.subr.mxu0 0.0
  %1738 = vmatpush1.msra.mxu0 %v1380
  %1739 = vmatprep.subr.mxu0 0.0
  %1740 = vmatpush1.msra.mxu0 %v1381
  %1741 = vmatprep.subr.mxu0 0.0
  %1742 = vmatpush1.msra.mxu0 %v1382
  %1743 = vmatprep.subr.mxu0 0.0
  %1744 = vmatpush1.msra.mxu0 %v1383
  %1745 = vmatprep.subr.mxu0 0.0
  %1746 = vmatpush1.msra.mxu0 0.0
  %1747 = vmatprep.subr.mxu0 0.0
  %1748 = vmatpush1.msra.mxu0 0.0
  %1749 = vmatprep.subr.mxu0 0.0
  %1750 = vmatpush1.msra.mxu0 0.0
  %1751 = vmatprep.subr.mxu0 0.0
  %1752 = vmatpush1.msra.mxu0 0.0
  %1753 = vmatprep.subr.mxu0 0.0
  %1754 = vmatpush1.msra.mxu0 0.0
  %1755 = vmatprep.subr.mxu0 0.0
  %1756 = vmatpush1.msra.mxu0 0.0
  %1757 = vmatprep.subr.mxu0 0.0
  %1758 = vmatpush1.msra.mxu0 0.0
  %1759 = vmatprep.subr.mxu0 0.0
  %1760 = vmatpush1.msra.mxu0 0.0
  %1761 = vmatprep.subr.mxu0 0.0
  %1762 = vmatpush1.msra.mxu0 0.0
  %1763 = vmatprep.subr.mxu0 0.0
  %1764 = vmatpush1.msra.mxu0 0.0
  %1765 = vmatprep.subr.mxu0 0.0
  %1766 = vmatpush1.msra.mxu0 0.0
  %1767 = vmatprep.subr.mxu0 0.0
  %1768 = vmatpush1.msra.mxu0 0.0
  %1769 = vmatprep.subr.mxu0 0.0
  %1770 = vmatpush1.msra.mxu0 0.0
  %1771 = vmatprep.subr.mxu0 0.0
  %1772 = vmatpush1.msra.mxu0 0.0
  %1773 = vmatprep.subr.mxu0 0.0
  %1774 = vmatpush1.msra.mxu0 0.0
  %1775 = vmatprep.subr.mxu0 0.0
  %1776 = vmatpush1.msra.mxu0 0.0
  %1777 = vmatprep.subr.mxu0 0.0
  %1778 = vmatpush1.msra.mxu0 0.0
  %1779 = vmatprep.subr.mxu0 0.0
  %1780 = vmatpush1.msra.mxu0 0.0
  %1781 = vmatprep.subr.mxu0 0.0
  %1782 = vmatpush1.msra.mxu0 0.0
  %1783 = vmatprep.subr.mxu0 0.0
  %1784 = vmatpush1.msra.mxu0 0.0
  %1785 = vmatprep.subr.mxu0 0.0
  %1786 = vmatpush1.msra.mxu0 0.0
  %1787 = vmatprep.subr.mxu0 0.0
  %1788 = vmatpush1.msra.mxu0 0.0
  %1789 = vmatprep.subr.mxu0 0.0
  %1790 = vmatpush1.msra.mxu0 0.0
  %1791 = vmatprep.subr.mxu0 0.0
  %1792 = vmatpush1.msra.mxu0 0.0
  %1793 = vmatprep.mubr.f32.mxu0 0.0
  %1794 = vmatmul.mubr.f32.gmra.mrb[0].mxu0 %v1727
  %v1795 = vpop.f32.mrb[0].mxu0
  %v1796 = vadd.f32 0.0, %v1795
  %v1797 = vpop.f32.mrb[0].mxu0
  %1798 = vdwg.mxu0
  %v1799 = vadd.f32 %v1725, %v1796
  %v1800 = vxor.u32 %v1799, 2147483648
  %v1801 = vmul.f32 %v1800, 1.442695
  %v1802 = vpow.pop %v1801
  %v1803 = vadd.f32 %v1802, 1.0
  %v1804 = vrcp.pop %v1803
  %v1805 = vmul.f32 1.0, %v1804
  %v1806 = vtanh.pop %v1799
  %v1807 = vmul.f32 %v1805, %v1711
  %1809 = vrot.lane.b32.xlu0 %v1806, 64
  %v1810 = vpop.permute.xlu0 %1809
  %v1812 = vmul.f32 %v1805, %v1810
  %1814 = vrot.lane.b32.xlu0 %v1812, 32
  %v1815 = vpop.permute.xlu0 %1814
  %v1817 = vadd.f32 %v1807, %v1815
  %v1818 = vtanh.pop %v1817
  %1820 = vrot.lane.b32.xlu0 %v1818, 64
  %v1821 = vpop.permute.xlu0 %1820
  %v1823 = vmul.f32 %v1805, %v1821
  %v1824 = vmul.f32 %v1823, %v743
  %v1825 = vmul.f32 %v1817, %v743
  %1827 = vrot.lane.b32.xlu0 %v1824, 32
  %v1828 = vpop.permute.xlu0 %1827
  %1830 = vrot.lane.b32.xlu0 %v1824, 64
  %v1831 = vpop.permute.xlu0 %1830
  %v1833 = vsel %vm400, %v1828, %v1831
  %v1834 = vmul.f32 %v1833, %v47
  %v1836 = vrot.slane %v1368, 4
  %v1838 = vsel %vm92, %v1372, %v1836
  %v1840 = vsel %vm176, %v1834, 0
  %1842 = vmatprep.subr.mxu0 0.0
  %1843 = vmatpush1.msra.mxu0 %v1376
  %1844 = vmatprep.subr.mxu0 0.0
  %1845 = vmatpush1.msra.mxu0 %v1377
  %1846 = vmatprep.subr.mxu0 0.0
  %1847 = vmatpush1.msra.mxu0 %v1378
  %1848 = vmatprep.subr.mxu0 0.0
  %1849 = vmatpush1.msra.mxu0 %v1379
  %1850 = vmatprep.subr.mxu0 0.0
  %1851 = vmatpush1.msra.mxu0 %v1380
  %1852 = vmatprep.subr.mxu0 0.0
  %1853 = vmatpush1.msra.mxu0 %v1381
  %1854 = vmatprep.subr.mxu0 0.0
  %1855 = vmatpush1.msra.mxu0 %v1382
  %1856 = vmatprep.subr.mxu0 0.0
  %1857 = vmatpush1.msra.mxu0 %v1383
  %1858 = vmatprep.subr.mxu0 0.0
  %1859 = vmatpush1.msra.mxu0 0.0
  %1860 = vmatprep.subr.mxu0 0.0
  %1861 = vmatpush1.msra.mxu0 0.0
  %1862 = vmatprep.subr.mxu0 0.0
  %1863 = vmatpush1.msra.mxu0 0.0
  %1864 = vmatprep.subr.mxu0 0.0
  %1865 = vmatpush1.msra.mxu0 0.0
  %1866 = vmatprep.subr.mxu0 0.0
  %1867 = vmatpush1.msra.mxu0 0.0
  %1868 = vmatprep.subr.mxu0 0.0
  %1869 = vmatpush1.msra.mxu0 0.0
  %1870 = vmatprep.subr.mxu0 0.0
  %1871 = vmatpush1.msra.mxu0 0.0
  %1872 = vmatprep.subr.mxu0 0.0
  %1873 = vmatpush1.msra.mxu0 0.0
  %1874 = vmatprep.subr.mxu0 0.0
  %1875 = vmatpush1.msra.mxu0 0.0
  %1876 = vmatprep.subr.mxu0 0.0
  %1877 = vmatpush1.msra.mxu0 0.0
  %1878 = vmatprep.subr.mxu0 0.0
  %1879 = vmatpush1.msra.mxu0 0.0
  %1880 = vmatprep.subr.mxu0 0.0
  %1881 = vmatpush1.msra.mxu0 0.0
  %1882 = vmatprep.subr.mxu0 0.0
  %1883 = vmatpush1.msra.mxu0 0.0
  %1884 = vmatprep.subr.mxu0 0.0
  %1885 = vmatpush1.msra.mxu0 0.0
  %1886 = vmatprep.subr.mxu0 0.0
  %1887 = vmatpush1.msra.mxu0 0.0
  %1888 = vmatprep.subr.mxu0 0.0
  %1889 = vmatpush1.msra.mxu0 0.0
  %1890 = vmatprep.subr.mxu0 0.0
  %1891 = vmatpush1.msra.mxu0 0.0
  %1892 = vmatprep.subr.mxu0 0.0
  %1893 = vmatpush1.msra.mxu0 0.0
  %1894 = vmatprep.subr.mxu0 0.0
  %1895 = vmatpush1.msra.mxu0 0.0
  %1896 = vmatprep.subr.mxu0 0.0
  %1897 = vmatpush1.msra.mxu0 0.0
  %1898 = vmatprep.subr.mxu0 0.0
  %1899 = vmatpush1.msra.mxu0 0.0
  %1900 = vmatprep.subr.mxu0 0.0
  %1901 = vmatpush1.msra.mxu0 0.0
  %1902 = vmatprep.subr.mxu0 0.0
  %1903 = vmatpush1.msra.mxu0 0.0
  %1904 = vmatprep.subr.mxu0 0.0
  %1905 = vmatpush1.msra.mxu0 0.0
  %1906 = vmatprep.mubr.f32.mxu0 0.0
  %1907 = vmatmul.mubr.f32.gmra.mrb[0].mxu0 %v1840
  %v1908 = vpop.f32.mrb[0].mxu0
  %v1909 = vadd.f32 0.0, %v1908
  %v1910 = vpop.f32.mrb[0].mxu0
  %1911 = vdwg.mxu0
  %v1912 = vadd.f32 %v1838, %v1909
  %v1913 = vxor.u32 %v1912, 2147483648
  %v1914 = vmul.f32 %v1913, 1.442695
  %v1915 = vpow.pop %v1914
  %v1916 = vadd.f32 %v1915, 1.0
  %v1917 = vrcp.pop %v1916
  %v1918 = vmul.f32 1.0, %v1917
  %v1919 = vtanh.pop %v1912
  %v1920 = vmul.f32 %v1918, %v1825
  %1922 = vrot.lane.b32.xlu0 %v1919, 64
  %v1923 = vpop.permute.xlu0 %1922
  %v1925 = vmul.f32 %v1918, %v1923
  %1927 = vrot.lane.b32.xlu0 %v1925, 32
  %v1928 = vpop.permute.xlu0 %1927
  %v1930 = vadd.f32 %v1920, %v1928
  %v1931 = vtanh.pop %v1930
  %1933 = vrot.lane.b32.xlu0 %v1931, 64
  %v1934 = vpop.permute.xlu0 %1933
  %v1936 = vmul.f32 %v1918, %v1934
  %v1937 = vmul.f32 %v1936, %v860
  %v1938 = vmul.f32 %v1930, %v860
  %1940 = vrot.lane.b32.xlu0 %v1937, 32
  %v1941 = vpop.permute.xlu0 %1940
  %1943 = vrot.lane.b32.xlu0 %v1937, 64
  %v1944 = vpop.permute.xlu0 %1943
  %v1946 = vsel %vm400, %v1941, %v1944
  %v1947 = vmul.f32 %v1946, %v47
  %v1949 = vrot.slane %v1372, 2
  %v1951 = vrot.slane %v1368, 2
  %v1953 = vsel %vm92, %v1949, %v1951
  %v1955 = vsel %vm176, %v1947, 0
  %1957 = vmatprep.subr.mxu0 0.0
  %1958 = vmatpush1.msra.mxu0 %v1376
  %1959 = vmatprep.subr.mxu0 0.0
  %1960 = vmatpush1.msra.mxu0 %v1377
  %1961 = vmatprep.subr.mxu0 0.0
  %1962 = vmatpush1.msra.mxu0 %v1378
  %1963 = vmatprep.subr.mxu0 0.0
  %1964 = vmatpush1.msra.mxu0 %v1379
  %1965 = vmatprep.subr.mxu0 0.0
  %1966 = vmatpush1.msra.mxu0 %v1380
  %1967 = vmatprep.subr.mxu0 0.0
  %1968 = vmatpush1.msra.mxu0 %v1381
  %1969 = vmatprep.subr.mxu0 0.0
  %1970 = vmatpush1.msra.mxu0 %v1382
  %1971 = vmatprep.subr.mxu0 0.0
  %1972 = vmatpush1.msra.mxu0 %v1383
  %1973 = vmatprep.subr.mxu0 0.0
  %1974 = vmatpush1.msra.mxu0 0.0
  %1975 = vmatprep.subr.mxu0 0.0
  %1976 = vmatpush1.msra.mxu0 0.0
  %1977 = vmatprep.subr.mxu0 0.0
  %1978 = vmatpush1.msra.mxu0 0.0
  %1979 = vmatprep.subr.mxu0 0.0
  %1980 = vmatpush1.msra.mxu0 0.0
  %1981 = vmatprep.subr.mxu0 0.0
  %1982 = vmatpush1.msra.mxu0 0.0
  %1983 = vmatprep.subr.mxu0 0.0
  %1984 = vmatpush1.msra.mxu0 0.0
  %1985 = vmatprep.subr.mxu0 0.0
  %1986 = vmatpush1.msra.mxu0 0.0
  %1987 = vmatprep.subr.mxu0 0.0
  %1988 = vmatpush1.msra.mxu0 0.0
  %1989 = vmatprep.subr.mxu0 0.0
  %1990 = vmatpush1.msra.mxu0 0.0
  %1991 = vmatprep.subr.mxu0 0.0
  %1992 = vmatpush1.msra.mxu0 0.0
  %1993 = vmatprep.subr.mxu0 0.0
  %1994 = vmatpush1.msra.mxu0 0.0
  %1995 = vmatprep.subr.mxu0 0.0
  %1996 = vmatpush1.msra.mxu0 0.0
  %1997 = vmatprep.subr.mxu0 0.0
  %1998 = vmatpush1.msra.mxu0 0.0
  %1999 = vmatprep.subr.mxu0 0.0
  %2000 = vmatpush1.msra.mxu0 0.0
  %2001 = vmatprep.subr.mxu0 0.0
  %2002 = vmatpush1.msra.mxu0 0.0
  %2003 = vmatprep.subr.mxu0 0.0
  %2004 = vmatpush1.msra.mxu0 0.0
  %2005 = vmatprep.subr.mxu0 0.0
  %2006 = vmatpush1.msra.mxu0 0.0
  %2007 = vmatprep.subr.mxu0 0.0
  %2008 = vmatpush1.msra.mxu0 0.0
  %2009 = vmatprep.subr.mxu0 0.0
  %2010 = vmatpush1.msra.mxu0 0.0
  %2011 = vmatprep.subr.mxu0 0.0
  %2012 = vmatpush1.msra.mxu0 0.0
  %2013 = vmatprep.subr.mxu0 0.0
  %2014 = vmatpush1.msra.mxu0 0.0
  %2015 = vmatprep.subr.mxu0 0.0
  %2016 = vmatpush1.msra.mxu0 0.0
  %2017 = vmatprep.subr.mxu0 0.0
  %2018 = vmatpush1.msra.mxu0 0.0
  %2019 = vmatprep.subr.mxu0 0.0
  %2020 = vmatpush1.msra.mxu0 0.0
  %2021 = vmatprep.mubr.f32.mxu0 0.0
  %2022 = vmatmul.mubr.f32.gmra.mrb[0].mxu0 %v1955
  %v2023 = vpop.f32.mrb[0].mxu0
  %v2024 = vadd.f32 0.0, %v2023
  %v2025 = vpop.f32.mrb[0].mxu0
  %2026 = vdwg.mxu0
  %v2027 = vadd.f32 %v1953, %v2024
  %v2028 = vxor.u32 %v2027, 2147483648
  %v2029 = vmul.f32 %v2028, 1.442695
  %v2030 = vpow.pop %v2029
  %v2031 = vadd.f32 %v2030, 1.0
  %v2032 = vrcp.pop %v2031
  %v2033 = vmul.f32 1.0, %v2032
  %v2034 = vtanh.pop %v2027
  %v2035 = vmul.f32 %v2033, %v1938
  %2037 = vrot.lane.b32.xlu0 %v2034, 64
  %v2038 = vpop.permute.xlu0 %2037
  %v2040 = vmul.f32 %v2033, %v2038
  %2042 = vrot.lane.b32.xlu0 %v2040, 32
  %v2043 = vpop.permute.xlu0 %2042
  %v2045 = vadd.f32 %v2035, %v2043
  %v2046 = vtanh.pop %v2045
  %2048 = vrot.lane.b32.xlu0 %v2046, 64
  %v2049 = vpop.permute.xlu0 %2048
  %v2051 = vmul.f32 %v2033, %v2049
  %v2052 = vmul.f32 %v2051, %v979
  %v2053 = vmul.f32 %v2045, %v979
  %2055 = vrot.lane.b32.xlu0 %v2052, 32
  %v2056 = vpop.permute.xlu0 %2055
  %2058 = vrot.lane.b32.xlu0 %v2052, 64
  %v2059 = vpop.permute.xlu0 %2058
  %v2061 = vsel %vm400, %v2056, %v2059
  %v2062 = vmul.f32 %v2061, %v47
  %v2063 = vrot.slane %v1372, 4
  %v2065 = vsel %vm92, %v2063, %v1368
  %v2067 = vsel %vm176, %v2062, 0
  %2069 = vmatprep.subr.mxu0 0.0
  %2070 = vmatpush1.msra.mxu0 %v1376
  %2071 = vmatprep.subr.mxu0 0.0
  %2072 = vmatpush1.msra.mxu0 %v1377
  %2073 = vmatprep.subr.mxu0 0.0
  %2074 = vmatpush1.msra.mxu0 %v1378
  %2075 = vmatprep.subr.mxu0 0.0
  %2076 = vmatpush1.msra.mxu0 %v1379
  %2077 = vmatprep.subr.mxu0 0.0
  %2078 = vmatpush1.msra.mxu0 %v1380
  %2079 = vmatprep.subr.mxu0 0.0
  %2080 = vmatpush1.msra.mxu0 %v1381
  %2081 = vmatprep.subr.mxu0 0.0
  %2082 = vmatpush1.msra.mxu0 %v1382
  %2083 = vmatprep.subr.mxu0 0.0
  %2084 = vmatpush1.msra.mxu0 %v1383
  %2085 = vmatprep.subr.mxu0 0.0
  %2086 = vmatpush1.msra.mxu0 0.0
  %2087 = vmatprep.subr.mxu0 0.0
  %2088 = vmatpush1.msra.mxu0 0.0
  %2089 = vmatprep.subr.mxu0 0.0
  %2090 = vmatpush1.msra.mxu0 0.0
  %2091 = vmatprep.subr.mxu0 0.0
  %2092 = vmatpush1.msra.mxu0 0.0
  %2093 = vmatprep.subr.mxu0 0.0
  %2094 = vmatpush1.msra.mxu0 0.0
  %2095 = vmatprep.subr.mxu0 0.0
  %2096 = vmatpush1.msra.mxu0 0.0
  %2097 = vmatprep.subr.mxu0 0.0
  %2098 = vmatpush1.msra.mxu0 0.0
  %2099 = vmatprep.subr.mxu0 0.0
  %2100 = vmatpush1.msra.mxu0 0.0
  %2101 = vmatprep.subr.mxu0 0.0
  %2102 = vmatpush1.msra.mxu0 0.0
  %2103 = vmatprep.subr.mxu0 0.0
  %2104 = vmatpush1.msra.mxu0 0.0
  %2105 = vmatprep.subr.mxu0 0.0
  %2106 = vmatpush1.msra.mxu0 0.0
  %2107 = vmatprep.subr.mxu0 0.0
  %2108 = vmatpush1.msra.mxu0 0.0
  %2109 = vmatprep.subr.mxu0 0.0
  %2110 = vmatpush1.msra.mxu0 0.0
  %2111 = vmatprep.subr.mxu0 0.0
  %2112 = vmatpush1.msra.mxu0 0.0
  %2113 = vmatprep.subr.mxu0 0.0
  %2114 = vmatpush1.msra.mxu0 0.0
  %2115 = vmatprep.subr.mxu0 0.0
  %2116 = vmatpush1.msra.mxu0 0.0
  %2117 = vmatprep.subr.mxu0 0.0
  %2118 = vmatpush1.msra.mxu0 0.0
  %2119 = vmatprep.subr.mxu0 0.0
  %2120 = vmatpush1.msra.mxu0 0.0
  %2121 = vmatprep.subr.mxu0 0.0
  %2122 = vmatpush1.msra.mxu0 0.0
  %2123 = vmatprep.subr.mxu0 0.0
  %2124 = vmatpush1.msra.mxu0 0.0
  %2125 = vmatprep.subr.mxu0 0.0
  %2126 = vmatpush1.msra.mxu0 0.0
  %2127 = vmatprep.subr.mxu0 0.0
  %2128 = vmatpush1.msra.mxu0 0.0
  %2129 = vmatprep.subr.mxu0 0.0
  %2130 = vmatpush1.msra.mxu0 0.0
  %2131 = vmatprep.subr.mxu0 0.0
  %2132 = vmatpush1.msra.mxu0 0.0
  %2133 = vmatprep.mubr.f32.mxu0 0.0
  %2134 = vmatmul.mubr.f32.gmra.mrb[0].mxu0 %v2067
  %v2135 = vpop.f32.mrb[0].mxu0
  %v2136 = vadd.f32 0.0, %v2135
  %v2137 = vpop.f32.mrb[0].mxu0
  %2138 = vdwg.mxu0
  %v2139 = vadd.f32 %v2065, %v2136
  %v2140 = vxor.u32 %v2139, 2147483648
  %v2141 = vmul.f32 %v2140, 1.442695
  %v2142 = vpow.pop %v2141
  %v2143 = vadd.f32 %v2142, 1.0
  %v2144 = vrcp.pop %v2143
  %v2145 = vmul.f32 1.0, %v2144
  %v2146 = vtanh.pop %v2139
  %v2147 = vmul.f32 %v2145, %v2053
  %2149 = vrot.lane.b32.xlu0 %v2146, 64
  %v2150 = vpop.permute.xlu0 %2149
  %v2152 = vmul.f32 %v2145, %v2150
  %2154 = vrot.lane.b32.xlu0 %v2152, 32
  %v2155 = vpop.permute.xlu0 %2154
  %v2157 = vadd.f32 %v2147, %v2155
  %v2158 = vtanh.pop %v2157
  %2160 = vrot.lane.b32.xlu0 %v2158, 64
  %v2161 = vpop.permute.xlu0 %2160
  %v2163 = vmul.f32 %v2145, %v2161
  %v2164 = vmul.f32 %v2163, %v1095
  %v2165 = vmul.f32 %v2157, %v1095
  %2167 = vrot.lane.b32.xlu0 %v2164, 32
  %v2168 = vpop.permute.xlu0 %2167
  %2170 = vrot.lane.b32.xlu0 %v2164, 64
  %v2171 = vpop.permute.xlu0 %2170
  %v2173 = vsel %vm400, %v2168, %v2171
  %v2174 = vmul.f32 %v2173, %v47
  %v2175 = vrot.slane %v1372, 6
  %v2177 = vrot.slane %v1368, 6
  %v2179 = vsel %vm92, %v2175, %v2177
  %v2181 = vsel %vm176, %v2174, 0
  %2183 = vmatprep.subr.mxu0 0.0
  %2184 = vmatpush1.msra.mxu0 %v1376
  %2185 = vmatprep.subr.mxu0 0.0
  %2186 = vmatpush1.msra.mxu0 %v1377
  %2187 = vmatprep.subr.mxu0 0.0
  %2188 = vmatpush1.msra.mxu0 %v1378
  %2189 = vmatprep.subr.mxu0 0.0
  %2190 = vmatpush1.msra.mxu0 %v1379
  %2191 = vmatprep.subr.mxu0 0.0
  %2192 = vmatpush1.msra.mxu0 %v1380
  %2193 = vmatprep.subr.mxu0 0.0
  %2194 = vmatpush1.msra.mxu0 %v1381
  %2195 = vmatprep.subr.mxu0 0.0
  %2196 = vmatpush1.msra.mxu0 %v1382
  %2197 = vmatprep.subr.mxu0 0.0
  %2198 = vmatpush1.msra.mxu0 %v1383
  %2199 = vmatprep.subr.mxu0 0.0
  %2200 = vmatpush1.msra.mxu0 0.0
  %2201 = vmatprep.subr.mxu0 0.0
  %2202 = vmatpush1.msra.mxu0 0.0
  %2203 = vmatprep.subr.mxu0 0.0
  %2204 = vmatpush1.msra.mxu0 0.0
  %2205 = vmatprep.subr.mxu0 0.0
  %2206 = vmatpush1.msra.mxu0 0.0
  %2207 = vmatprep.subr.mxu0 0.0
  %2208 = vmatpush1.msra.mxu0 0.0
  %2209 = vmatprep.subr.mxu0 0.0
  %2210 = vmatpush1.msra.mxu0 0.0
  %2211 = vmatprep.subr.mxu0 0.0
  %2212 = vmatpush1.msra.mxu0 0.0
  %2213 = vmatprep.subr.mxu0 0.0
  %2214 = vmatpush1.msra.mxu0 0.0
  %2215 = vmatprep.subr.mxu0 0.0
  %2216 = vmatpush1.msra.mxu0 0.0
  %2217 = vmatprep.subr.mxu0 0.0
  %2218 = vmatpush1.msra.mxu0 0.0
  %2219 = vmatprep.subr.mxu0 0.0
  %2220 = vmatpush1.msra.mxu0 0.0
  %2221 = vmatprep.subr.mxu0 0.0
  %2222 = vmatpush1.msra.mxu0 0.0
  %2223 = vmatprep.subr.mxu0 0.0
  %2224 = vmatpush1.msra.mxu0 0.0
  %2225 = vmatprep.subr.mxu0 0.0
  %2226 = vmatpush1.msra.mxu0 0.0
  %2227 = vmatprep.subr.mxu0 0.0
  %2228 = vmatpush1.msra.mxu0 0.0
  %2229 = vmatprep.subr.mxu0 0.0
  %2230 = vmatpush1.msra.mxu0 0.0
  %2231 = vmatprep.subr.mxu0 0.0
  %2232 = vmatpush1.msra.mxu0 0.0
  %2233 = vmatprep.subr.mxu0 0.0
  %2234 = vmatpush1.msra.mxu0 0.0
  %2235 = vmatprep.subr.mxu0 0.0
  %2236 = vmatpush1.msra.mxu0 0.0
  %2237 = vmatprep.subr.mxu0 0.0
  %2238 = vmatpush1.msra.mxu0 0.0
  %2239 = vmatprep.subr.mxu0 0.0
  %2240 = vmatpush1.msra.mxu0 0.0
  %2241 = vmatprep.subr.mxu0 0.0
  %2242 = vmatpush1.msra.mxu0 0.0
  %2243 = vmatprep.subr.mxu0 0.0
  %2244 = vmatpush1.msra.mxu0 0.0
  %2245 = vmatprep.subr.mxu0 0.0
  %2246 = vmatpush1.msra.mxu0 0.0
  %2247 = vmatprep.mubr.f32.mxu0 0.0
  %2248 = vmatmul.mubr.f32.gmra.mrb[0].mxu0 %v2181
  %v2249 = vpop.f32.mrb[0].mxu0
  %v2250 = vadd.f32 0.0, %v2249
  %v2251 = vpop.f32.mrb[0].mxu0
  %2252 = vdwg.mxu0
  %v2253 = vadd.f32 %v2179, %v2250
  %v2254 = vxor.u32 %v2253, 2147483648
  %v2255 = vmul.f32 %v2254, 1.442695
  %v2256 = vpow.pop %v2255
  %v2257 = vadd.f32 %v2256, 1.0
  %v2258 = vrcp.pop %v2257
  %v2259 = vmul.f32 1.0, %v2258
  %v2260 = vtanh.pop %v2253
  %v2261 = vmul.f32 %v2259, %v2165
  %2263 = vrot.lane.b32.xlu0 %v2260, 64
  %v2264 = vpop.permute.xlu0 %2263
  %v2266 = vmul.f32 %v2259, %v2264
  %2268 = vrot.lane.b32.xlu0 %v2266, 32
  %v2269 = vpop.permute.xlu0 %2268
  %v2271 = vadd.f32 %v2261, %v2269
  %v2272 = vtanh.pop %v2271
  %2274 = vrot.lane.b32.xlu0 %v2272, 64
  %v2275 = vpop.permute.xlu0 %2274
  %v2277 = vmul.f32 %v2259, %v2275
  %v2278 = vmul.f32 %v2277, %v1213
  %v2279 = vrot.slane %v1598, 6
  %v2281 = vrot.slane %v1710, 4
  %v2283 = vrot.slane %v1824, 2
  %v2285 = vrot.slane %v2052, 6
  %v2287 = vrot.slane %v2164, 4
  %v2290 = vrot.slane %v2278, 2
  %v2292 = vsel %vm92, %v1483, %v2279
  %v2293 = vsel %vm1230, %v2292, %v2281
  %v2294 = vsel %vm1232, %v2293, %v2283
  %v2295 = vsel %vm92, %v1937, %v2285
  %v2296 = vsel %vm1230, %v2295, %v2287
  %v2297 = vsel %vm1232, %v2296, %v2290
  %v2298 = vrot.slane %v1937, 4
  %v2300 = vrot.slane %v1483, 4
  %v2302 = vsel %vm92, %v2290, %v2164
  %v2303 = vsel %vm1230, %v2302, %v2285
  %v2304 = vsel %vm1232, %v2303, %v2298
  %v2305 = vsel %vm92, %v2283, %v1710
  %v2306 = vsel %vm1230, %v2305, %v2279
  %v2307 = vsel %vm1232, %v2306, %v2300
  %2310 = vrot.lane.b32.xlu0 %v2294, 32
  %v2311 = vpop.permute.xlu0 %2310
  %2312 = vrot.lane.b32.xlu0 %v2297, 32
  %v2313 = vpop.permute.xlu0 %2312
  %2318 = vrot.lane.b32.xlu0 %v2304, 64
  %v2319 = vpop.permute.xlu0 %2318
  %2320 = vrot.lane.b32.xlu0 %v2307, 64
  %v2321 = vpop.permute.xlu0 %2320
  %v2324 = vsel %vm400, %v2311, %v2319
  %v2325 = vsel %vm400, %v2313, %v2321
  %2326 = vst.msk [vmem:[%s10] sm:$0xff] %vm176, %v2324
  %2327 = vst.msk [vmem:[%s10 + $0x8] sm:$0xff] %vm176, %v2325
  // Predicated region
  $region42: #{edu_encoder_forward.1} parent=0 // pred_check
    _
  $region43: #{edu_encoder_forward.1} parent=0 // pred_check_branch
    %2329 = sbr.rel (0) target = $region45
  $region44: #{edu_encoder_forward.1} parent=0 // pred_region
    _
  $region45: #{edu_encoder_forward.1} parent=0 // pred_fallthru
    _
  // Predicated region
  $region46: #{edu_encoder_forward.1} parent=0 // pred_check
    _
  $region47: #{edu_encoder_forward.1} parent=0 // pred_check_branch
    %2331 = sbr.rel (0) target = $region49
  $region48: #{edu_encoder_forward.1} parent=0 // pred_region
    _
  $region49: #{edu_encoder_forward.1} parent=0 // pred_fallthru
    _

</llo_original>
